<compile_context>
chip_gen: v5e
topology: v5e:2x2
jax: 0.10.0
libtpu: 0.0.40
codegen_flags: <defaults>
</compile_context>

<pallas_src>
import functools

import jax
import jax.numpy as jnp
from jax import lax
from jax.experimental import pallas as pl
from jax.experimental.pallas import tpu as pltpu

# ----------------- small hyperparameters (hp) -----------------
N_MEL = 16                     # hp.n_mel_channels
REF_ENC_FILTERS = [4, 8, 16]   # hp.ref_enc_filters  (K = 3 conv layers)
REF_ENC_GRU_SIZE = 32          # hp.ref_enc_gru_size
TOKEN_NUM = 8                  # hp.token_num
TOKEN_EMB_SIZE = 32            # hp.token_embedding_size
NUM_HEADS = 4                  # hp.num_heads
BN_EPS = 1e-5


def _vmem():
    return pl.BlockSpec(memory_space=pltpu.MemorySpace.VMEM)


# ----------------- fused Pallas kernel -----------------
def gst_fused_kernel(
    x0_ref,
    a1_ref, aux1_ref, a2_ref, aux2_ref, a3_ref, aux3_ref,
    gw_ref, gb_ref, stl_ref,
    out_ref,
    *, t_steps, gru_h, conv_dims, inv_counts, units, n_scores,
):
    f32 = jnp.float32
    bf16 = jnp.bfloat16

    def conv_bn_relu(x, a_ref, aux_ref, dims, inv_cnt):
        f_out, c_pad = dims
        # 3x3 / stride-2 / pad-1 conv folded at fold time into a dense matmul
        # acting on the NHWC-flattened activation (bf16 operands, f32 acc).
        # Conv bias omitted: training-mode BN subtracts the batch mean, which
        # cancels a per-channel constant bias exactly.
        y = jnp.dot(x.astype(bf16), a_ref[...], preferred_element_type=f32)   # [N, F]

        pool = aux_ref[0:f_out, 0:c_pad]                         # [F, Cp] channel pooling
        ptg = aux_ref[f_out:f_out + c_pad, :]                    # [Cp, F] gamma * pool^T
        betaf = aux_ref[f_out + c_pad:f_out + c_pad + 1, :]      # [1, F]  beta per position

        # Training-mode BN batch statistics (biased variance) via ONE tiny
        # channel-pooling matmul on the stacked [sum(y); sum(y^2)] rows.
        ssum = jnp.concatenate(
            [jnp.sum(y, axis=0, keepdims=True),
             jnp.sum(y * y, axis=0, keepdims=True)], axis=0)     # [2, F]
        pc = jnp.dot(ssum, pool, preferred_element_type=f32)     # [2, Cp]
        mean_c = pc[0:1] * inv_cnt                               # [1, Cp]
        var_c = pc[1:2] * inv_cnt - mean_c * mean_c
        inv_c = lax.rsqrt(var_c + BN_EPS)                        # EUP
        # One matmul expands both scale and shift to per-position lanes.
        coef = jnp.concatenate([inv_c, -(mean_c * inv_c)], axis=0)   # [2, Cp]
        sf = jnp.dot(coef, ptg, preferred_element_type=f32)          # [2, F]
        return jnp.maximum(y * sf[0:1] + (sf[1:2] + betaf), 0.0)     # BN + ReLU

    # ---- ReferenceEncoder conv stack (activations stay [N, F] in VMEM) ----
    x1 = conv_bn_relu(x0_ref[...], a1_ref, aux1_ref, conv_dims[0], inv_counts[0])
    x2 = conv_bn_relu(x1, a2_ref, aux2_ref, conv_dims[1], inv_counts[1])
    x3 = conv_bn_relu(x2, a3_ref, aux3_ref, conv_dims[2], inv_counts[2])
    # x3: [N, T * W3 * C3] NHWC-flat; the block-diag GRU input weights already
    # absorb PyTorch's transpose(1,2).view(N, T, C*W) reorder.

    # ---- GRU ----
    h3 = 3 * gru_h
    n_x3 = conv_dims[2][0]                                       # T * dp
    # Hoisted input projection: ONE matmul for all gates and all timesteps.
    gi_all = jnp.dot(x3.astype(bf16), gw_ref[0:n_x3, :],
                     preferred_element_type=f32) + gb_ref[0:1, :]    # [N, T*3H]
    whh = gw_ref[n_x3:n_x3 + gru_h, 0:h3]                            # [H, 3H] (r|z|n)
    gbv = gb_ref[...]                                                # [2, T*3H]
    bhh = gbv[1:2, 0:h3]                                             # [1, 3H]

    # t = 0 peeled: h_prev == 0, so the recurrent matmul vanishes (gh = bhh).
    pre = gi_all[:, 0:h3]
    rz = jax.nn.sigmoid(pre[:, 0:2 * gru_h] + bhh[:, 0:2 * gru_h])
    r = rz[:, 0:gru_h]
    z = rz[:, gru_h:2 * gru_h]
    n_t = jnp.tanh(pre[:, 2 * gru_h:h3] + r * bhh[:, 2 * gru_h:h3])
    h = (1.0 - z) * n_t

    for t in range(1, t_steps):   # tiny static trip count -> unrolled
        gh = jnp.dot(h.astype(bf16), whh, preferred_element_type=f32) + bhh
        pre = gi_all[:, t * h3:(t + 1) * h3]
        rz = jax.nn.sigmoid(pre[:, 0:2 * gru_h] + gh[:, 0:2 * gru_h])
        r = rz[:, 0:gru_h]
        z = rz[:, gru_h:2 * gru_h]
        n_t = jnp.tanh(pre[:, 2 * gru_h:h3] + r * gh[:, 2 * gru_h:h3])
        h = (1.0 - z) * n_t + z * h

    # ---- STL multi-head attention (fully collapsed, no per-head loop) ----
    # scores = h @ (Wq^T @ blockdiag(K_h^T)) / sqrt(d_k)   (folded at fold time)
    sc = jnp.dot(h.astype(bf16), stl_ref[0:gru_h, 0:n_scores],
                 preferred_element_type=f32)                     # [N, n_heads*T_tok]
    m = jnp.max(sc, axis=-1, keepdims=True)                      # row max (valid per segment)
    e = jnp.exp(sc - m)
    # [num | den] = e @ [blockdiag(V_h) | blockdiag(ones)]  -> one matmul
    vo = jnp.dot(e.astype(bf16), stl_ref[gru_h:gru_h + n_scores, :],
                 preferred_element_type=f32)                     # [N, 2*units]
    out_ref[...] = vo[:, 0:units] * pl.reciprocal(vo[:, units:2 * units], approx=True)


# ----------------- wrapper -----------------
@functools.partial(jax.jit, static_argnums=(0, 1, 2))
def _gst_pallas(t_steps, inv_counts, conv_dims, x0, *tensors):
    batch = x0.shape[0]
    kernel = functools.partial(
        gst_fused_kernel,
        t_steps=t_steps, gru_h=REF_ENC_GRU_SIZE,
        conv_dims=conv_dims, inv_counts=inv_counts,
        units=TOKEN_EMB_SIZE, n_scores=NUM_HEADS * TOKEN_NUM,
    )
    return pl.pallas_call(
        kernel,
        out_shape=jax.ShapeDtypeStruct((batch, TOKEN_EMB_SIZE), jnp.float32),
        in_specs=[_vmem() for _ in range(1 + len(tensors))],
        out_specs=_vmem(),
    )(x0, *tensors)


def gst_forward(folded, inputs):
    """inputs: [N, T_in, n_mel]  ->  style_embed: [N, 1, token_embedding_size]"""
    n, t_in, n_mel = inputs.shape
    # torch: inputs.view(N, 1, -1, n_mel)  (NCHW, C=1)  -> NHWC flat here
    x0 = inputs.reshape(n, t_in * n_mel)
    h, w = t_in, n_mel
    inv_counts = []
    for _ in REF_ENC_FILTERS:
        h, w = (h - 1) // 2 + 1, (w - 1) // 2 + 1
        inv_counts.append(1.0 / float(n * h * w))     # BN batch-stat denominators
    assert h == folded["t_steps"], "params were folded for a different T_in"
    style = _gst_pallas(folded["t_steps"], tuple(inv_counts), folded["conv_dims"],
                        x0, *folded["tensors"])
    return style[:, None, :]


# ----------------- parameter construction / folding (one-time, plain JAX) -----------------
def calc_channels(length, k, s, p, n_convs):
    for _ in range(n_convs):
        length = (length - k + 2 * p) // s + 1
    return length


def init_params(key):
    """Raw parameters in PyTorch layouts (Conv2d OIHW, GRU [3H,*] r|z|n, Linear [out,in])."""
    keys = jax.random.split(key, 16)
    ki = 0
    params = {"conv_w": [], "conv_b": [], "bn_g": [], "bn_b": []}
    filters = [1] + REF_ENC_FILTERS
    for i in range(len(REF_ENC_FILTERS)):
        ci, co = filters[i], filters[i + 1]
        params["conv_w"].append(
            jax.random.normal(keys[ki], (co, ci, 3, 3), jnp.float32) * 0.1); ki += 1
        params["conv_b"].append(
            jax.random.normal(keys[ki], (co,), jnp.float32) * 0.1); ki += 1
        params["bn_g"].append(jnp.ones((co,), jnp.float32))
        params["bn_b"].append(jnp.zeros((co,), jnp.float32))

    out_c = calc_channels(N_MEL, 3, 2, 1, len(REF_ENC_FILTERS))
    gru_in = REF_ENC_FILTERS[-1] * out_c
    hdim = REF_ENC_GRU_SIZE
    params["gru_wih"] = jax.random.normal(keys[ki], (3 * hdim, gru_in), jnp.float32) * 0.1; ki += 1
    params["gru_whh"] = jax.random.normal(keys[ki], (3 * hdim, hdim), jnp.float32) * 0.1; ki += 1
    params["gru_bih"] = jax.random.normal(keys[ki], (3 * hdim,), jnp.float32) * 0.1; ki += 1
    params["gru_bhh"] = jax.random.normal(keys[ki], (3 * hdim,), jnp.float32) * 0.1; ki += 1

    d_q = REF_ENC_GRU_SIZE
    d_k = TOKEN_EMB_SIZE // NUM_HEADS
    params["embed"] = jax.random.normal(keys[ki], (TOKEN_NUM, d_k), jnp.float32) * 0.5; ki += 1
    params["wq"] = jax.random.normal(keys[ki], (TOKEN_EMB_SIZE, d_q), jnp.float32) * 0.1; ki += 1
    params["wk"] = jax.random.normal(keys[ki], (TOKEN_EMB_SIZE, d_k), jnp.float32) * 0.1; ki += 1
    params["wv"] = jax.random.normal(keys[ki], (TOKEN_EMB_SIZE, d_k), jnp.float32) * 0.1; ki += 1
    return params


def fold_params(params, t_in):
    """One-time weight folding into the packed layouts the fused kernel consumes."""
    f32, bf16 = jnp.float32, jnp.bfloat16
    tensors = []
    conv_dims = []
    h, w = t_in, N_MEL
    filters = [1] + REF_ENC_FILTERS
    for i, co in enumerate(REF_ENC_FILTERS):
        ci = filters[i]
        wconv = params["conv_w"][i]               # [Co, Ci, 3, 3] (OIHW)
        ho, wo = (h - 1) // 2 + 1, (w - 1) // 2 + 1
        f_in, f_out = h * w * ci, ho * wo * co
        # Dense operator A^T[f_in, f_out] of the conv on NHWC-flattened data
        # (apply the conv to the identity basis == im2col @ W).
        eye = jnp.eye(f_in, dtype=f32).reshape(f_in, h, w, ci)
        a_t = lax.conv_general_dilated(
            eye, jnp.transpose(wconv, (2, 3, 1, 0)),             # OIHW -> HWIO
            window_strides=(2, 2), padding=((1, 1), (1, 1)),
            dimension_numbers=("NHWC", "HWIO", "NHWC"),
        ).reshape(f_in, f_out)
        # Conv bias params["conv_b"][i] intentionally NOT folded in: training-mode
        # BN batch-mean subtraction cancels a per-channel constant bias exactly.
        c_pad = ((co + 7) // 8) * 8                              # 8-sublane aligned
        pool = jnp.tile(jnp.eye(co, dtype=f32), (ho * wo, 1))    # [F_out, Co]
        pool_p = jnp.zeros((f_out, c_pad), f32).at[:, :co].set(pool)
        ptg = params["bn_g"][i].reshape(co, 1) * pool.T          # gamma folded into pool^T
        ptg_p = jnp.zeros((c_pad, f_out), f32).at[:co, :].set(ptg)
        betaf = jnp.tile(params["bn_b"][i], ho * wo)             # [F_out] per-position beta
        aux = jnp.zeros((f_out + c_pad + 1, f_out), f32)
        aux = aux.at[:f_out, :c_pad].set(pool_p)
        aux = aux.at[f_out:f_out + c_pad, :].set(ptg_p)
        aux = aux.at[f_out + c_pad, :].set(betaf)
        tensors += [a_t.astype(bf16), aux]
        conv_dims.append((f_out, c_pad))
        h, w = ho, wo

    # ---- GRU: one packed weight slab + one packed bias slab ----
    t_steps, w3, c3 = h, w, REF_ENC_FILTERS[-1]
    dp = w3 * c3                                  # per-timestep feature size
    hdim = REF_ENC_GRU_SIZE
    wih, whh = params["gru_wih"], params["gru_whh"]
    bih, bhh = params["gru_bih"], params["gru_bhh"]
    wg_perm = []
    for g in range(3):                            # gate order: r, z, n
        wg = wih[g * hdim:(g + 1) * hdim, :]      # [H, D], D index = c*W3 + w (torch order)
        # reorder input features from torch's (c, w) to our NHWC per-step (w, c)
        wg_perm.append(jnp.transpose(wg.reshape(hdim, c3, w3), (2, 1, 0)).reshape(dp, hdim))
    wg_cat = jnp.concatenate(wg_perm, axis=1)     # [dp, 3H]  (r|z|n)
    wih_cat = jnp.zeros((t_steps * dp, t_steps * 3 * hdim), f32)
    for t in range(t_steps):                      # block-diagonal over time
        wih_cat = wih_cat.at[t * dp:(t + 1) * dp,
                             t * 3 * hdim:(t + 1) * 3 * hdim].set(wg_cat)
    whh_all = jnp.concatenate([whh[g * hdim:(g + 1) * hdim, :].T for g in range(3)], axis=1)
    gw = jnp.zeros((t_steps * dp + hdim, t_steps * 3 * hdim), f32)
    gw = gw.at[:t_steps * dp, :].set(wih_cat)
    gw = gw.at[t_steps * dp:, :3 * hdim].set(whh_all)
    gb = jnp.zeros((2, t_steps * 3 * hdim), f32)
    gb = gb.at[0, :].set(jnp.tile(bih, t_steps))       # per-step [b_r|b_z|b_n]
    gb = gb.at[1, :3 * hdim].set(bhh)
    tensors += [gw.astype(bf16), gb]

    # ---- STL attention: everything input-independent precomputed ----
    s = TOKEN_EMB_SIZE // NUM_HEADS               # head size == key_dim
    units = TOKEN_EMB_SIZE
    n_scores = NUM_HEADS * TOKEN_NUM
    keys = jnp.tanh(params["embed"])              # [T_tok, d_k]
    k_all = keys @ params["wk"].T                 # [T_tok, U]
    v_all = keys @ params["wv"].T                 # [T_tok, U]
    kbdT = jnp.zeros((units, n_scores), f32)      # blockdiag(K_h^T)
    vbd = jnp.zeros((n_scores, units), f32)       # blockdiag(V_h)
    ones_bd = jnp.zeros((n_scores, units), f32)   # per-head ones (softmax denominators)
    for hd in range(NUM_HEADS):
        kbdT = kbdT.at[hd * s:(hd + 1) * s,
                       hd * TOKEN_NUM:(hd + 1) * TOKEN_NUM].set(k_all[:, hd * s:(hd + 1) * s].T)
        vbd = vbd.at[hd * TOKEN_NUM:(hd + 1) * TOKEN_NUM,
                     hd * s:(hd + 1) * s].set(v_all[:, hd * s:(hd + 1) * s])
        ones_bd = ones_bd.at[hd * TOKEN_NUM:(hd + 1) * TOKEN_NUM,
                             hd * s:(hd + 1) * s].set(1.0)
    wqk = (params["wq"].T @ kbdT) / (float(s) ** 0.5)   # [d_q, n_scores], scale folded in
    stl = jnp.zeros((REF_ENC_GRU_SIZE + n_scores, 2 * units), f32)
    stl = stl.at[:REF_ENC_GRU_SIZE, :n_scores].set(wqk)
    stl = stl.at[REF_ENC_GRU_SIZE:, :units].set(vbd)
    stl = stl.at[REF_ENC_GRU_SIZE:, units:].set(ones_bd)
    tensors += [stl.astype(bf16)]

    return {"tensors": tensors, "t_steps": t_steps, "conv_dims": tuple(conv_dims)}


if __name__ == "__main__":
    key = jax.random.PRNGKey(0)
    pkey, xkey = jax.random.split(key)
    params = init_params(pkey)
    inputs = jax.random.normal(xkey, (2, 16, N_MEL), jnp.float32)  # [N, Ty, n_mel]
    folded = fold_params(params, t_in=inputs.shape[1])
    out = gst_forward(folded, inputs)
    jax.block_until_ready(out)
    assert out.shape == (2, 1, TOKEN_EMB_SIZE), out.shape
    assert bool(jnp.all(jnp.isfinite(out)))
    print("KERNEL_OK")
</pallas_src>

<mosaic_0001>
module attributes {stable_mosaic.version = 11 : i64} {
  func.func @gst_fused_kernel(%arg0: memref<2x256xf32, #tpu.memory_space<vmem>>, %arg1: memref<256x256xbf16, #tpu.memory_space<vmem>>, %arg2: memref<265x256xf32, #tpu.memory_space<vmem>>, %arg3: memref<256x128xbf16, #tpu.memory_space<vmem>>, %arg4: memref<137x128xf32, #tpu.memory_space<vmem>>, %arg5: memref<128x64xbf16, #tpu.memory_space<vmem>>, %arg6: memref<81x64xf32, #tpu.memory_space<vmem>>, %arg7: memref<96x192xbf16, #tpu.memory_space<vmem>>, %arg8: memref<2x192xf32, #tpu.memory_space<vmem>>, %arg9: memref<64x64xbf16, #tpu.memory_space<vmem>>, %arg10: memref<2x32xf32, #tpu.memory_space<vmem>>) attributes {dimension_semantics = [], scalar_prefetch = 0 : i64, scratch_operands = 0 : i64, tpu.core_type = #tpu.core_type<tc>} {
    %c0 = arith.constant 0 : index
    %c0_0 = arith.constant 0 : index
    %0 = vector.load %arg0[%c0, %c0_0] : memref<2x256xf32, #tpu.memory_space<vmem>>, vector<2x256xf32>
    %1 = arith.truncf %0 : vector<2x256xf32> to vector<2x256xbf16>
    %c0_1 = arith.constant 0 : index
    %c0_2 = arith.constant 0 : index
    %2 = vector.load %arg1[%c0_1, %c0_2] : memref<256x256xbf16, #tpu.memory_space<vmem>>, vector<256x256xbf16>
    %cst = arith.constant dense<0.000000e+00> : vector<2x256xf32>
    %3 = tpu.matmul %1, %2, %cst {dimension_numbers = #tpu.dot_dimension_numbers<[1], [0], [0], [1], [0, 0, 1, 1], [], []>} : vector<2x256xbf16>, vector<256x256xbf16>, vector<2x256xf32> -> vector<2x256xf32>
    %c0_3 = arith.constant 0 : index
    %c0_4 = arith.constant 0 : index
    %4 = vector.load %arg2[%c0_3, %c0_4] : memref<265x256xf32, #tpu.memory_space<vmem>>, vector<256x8xf32>
    %c256 = arith.constant 256 : index
    %c0_5 = arith.constant 0 : index
    %5 = vector.load %arg2[%c256, %c0_5] : memref<265x256xf32, #tpu.memory_space<vmem>>, vector<8x256xf32>
    %c264 = arith.constant 264 : index
    %c0_6 = arith.constant 0 : index
    %6 = vector.load %arg2[%c264, %c0_6] : memref<265x256xf32, #tpu.memory_space<vmem>>, vector<1x256xf32>
    %cst_7 = arith.constant dense<0.000000e+00> : vector<256xf32>
    %7 = vector.multi_reduction <add>, %3, %cst_7 [0] : vector<2x256xf32> to vector<256xf32>
    %8 = vector.shape_cast %7 : vector<256xf32> to vector<1x256xf32>
    %9 = arith.mulf %3, %3 : vector<2x256xf32>
    %cst_8 = arith.constant dense<0.000000e+00> : vector<256xf32>
    %10 = vector.multi_reduction <add>, %9, %cst_8 [0] : vector<2x256xf32> to vector<256xf32>
    %11 = vector.shape_cast %10 : vector<256xf32> to vector<1x256xf32>
    %12 = tpu.concatenate %8, %11 in 0 : vector<1x256xf32>, vector<1x256xf32> -> vector<2x256xf32>
    %cst_9 = arith.constant dense<0.000000e+00> : vector<2x8xf32>
    %13 = tpu.matmul %12, %4, %cst_9 {dimension_numbers = #tpu.dot_dimension_numbers<[1], [0], [0], [1], [0, 0, 1, 1], [], []>} : vector<2x256xf32>, vector<256x8xf32>, vector<2x8xf32> -> vector<2x8xf32>
    %14 = vector.extract_strided_slice %13 {offsets = [0, 0], sizes = [1, 8], strides = [1, 1]} : vector<2x8xf32> to vector<1x8xf32>
    %cst_10 = arith.constant 7.812500e-03 : f32
    %15 = vector.broadcast %cst_10 : f32 to vector<1x8xf32>
    %16 = arith.mulf %14, %15 : vector<1x8xf32>
    %17 = vector.extract_strided_slice %13 {offsets = [1, 0], sizes = [1, 8], strides = [1, 1]} : vector<2x8xf32> to vector<1x8xf32>
    %cst_11 = arith.constant 7.812500e-03 : f32
    %18 = vector.broadcast %cst_11 : f32 to vector<1x8xf32>
    %19 = arith.mulf %17, %18 : vector<1x8xf32>
    %20 = arith.mulf %16, %16 : vector<1x8xf32>
    %21 = arith.subf %19, %20 : vector<1x8xf32>
    %cst_12 = arith.constant 9.99999974E-6 : f32
    %22 = vector.broadcast %cst_12 : f32 to vector<1x8xf32>
    %23 = arith.addf %21, %22 : vector<1x8xf32>
    %24 = math.rsqrt %23 : vector<1x8xf32>
    %25 = arith.mulf %16, %24 : vector<1x8xf32>
    %cst_13 = arith.constant 0.000000e+00 : f32
    %26 = vector.broadcast %cst_13 : f32 to vector<1x8xf32>
    %27 = arith.subf %26, %25 : vector<1x8xf32>
    %28 = tpu.concatenate %24, %27 in 0 : vector<1x8xf32>, vector<1x8xf32> -> vector<2x8xf32>
    %cst_14 = arith.constant dense<0.000000e+00> : vector<2x256xf32>
    %29 = tpu.matmul %28, %5, %cst_14 {dimension_numbers = #tpu.dot_dimension_numbers<[1], [0], [0], [1], [0, 0, 1, 1], [], []>} : vector<2x8xf32>, vector<8x256xf32>, vector<2x256xf32> -> vector<2x256xf32>
    %30 = vector.extract_strided_slice %29 {offsets = [0, 0], sizes = [1, 256], strides = [1, 1]} : vector<2x256xf32> to vector<1x256xf32>
    %31 = vector.broadcast %30 : vector<1x256xf32> to vector<2x256xf32>
    %32 = arith.mulf %3, %31 : vector<2x256xf32>
    %33 = vector.extract_strided_slice %29 {offsets = [1, 0], sizes = [1, 256], strides = [1, 1]} : vector<2x256xf32> to vector<1x256xf32>
    %34 = arith.addf %33, %6 : vector<1x256xf32>
    %35 = vector.broadcast %34 : vector<1x256xf32> to vector<2x256xf32>
    %36 = arith.addf %32, %35 : vector<2x256xf32>
    %cst_15 = arith.constant 0.000000e+00 : f32
    %37 = vector.broadcast %cst_15 : f32 to vector<2x256xf32>
    %38 = arith.maximumf %36, %37 : vector<2x256xf32>
    %39 = arith.truncf %38 : vector<2x256xf32> to vector<2x256xbf16>
    %c0_16 = arith.constant 0 : index
    %c0_17 = arith.constant 0 : index
    %40 = vector.load %arg3[%c0_16, %c0_17] : memref<256x128xbf16, #tpu.memory_space<vmem>>, vector<256x128xbf16>
    %cst_18 = arith.constant dense<0.000000e+00> : vector<2x128xf32>
    %41 = tpu.matmul %39, %40, %cst_18 {dimension_numbers = #tpu.dot_dimension_numbers<[1], [0], [0], [1], [0, 0, 1, 1], [], []>} : vector<2x256xbf16>, vector<256x128xbf16>, vector<2x128xf32> -> vector<2x128xf32>
    %c0_19 = arith.constant 0 : index
    %c0_20 = arith.constant 0 : index
    %42 = vector.load %arg4[%c0_19, %c0_20] : memref<137x128xf32, #tpu.memory_space<vmem>>, vector<128x8xf32>
    %c128 = arith.constant 128 : index
    %c0_21 = arith.constant 0 : index
    %43 = vector.load %arg4[%c128, %c0_21] : memref<137x128xf32, #tpu.memory_space<vmem>>, vector<8x128xf32>
    %c136 = arith.constant 136 : index
    %c0_22 = arith.constant 0 : index
    %44 = vector.load %arg4[%c136, %c0_22] : memref<137x128xf32, #tpu.memory_space<vmem>>, vector<1x128xf32>
    %cst_23 = arith.constant dense<0.000000e+00> : vector<128xf32>
    %45 = vector.multi_reduction <add>, %41, %cst_23 [0] : vector<2x128xf32> to vector<128xf32>
    %46 = vector.shape_cast %45 : vector<128xf32> to vector<1x128xf32>
    %47 = arith.mulf %41, %41 : vector<2x128xf32>
    %cst_24 = arith.constant dense<0.000000e+00> : vector<128xf32>
    %48 = vector.multi_reduction <add>, %47, %cst_24 [0] : vector<2x128xf32> to vector<128xf32>
    %49 = vector.shape_cast %48 : vector<128xf32> to vector<1x128xf32>
    %50 = tpu.concatenate %46, %49 in 0 : vector<1x128xf32>, vector<1x128xf32> -> vector<2x128xf32>
    %cst_25 = arith.constant dense<0.000000e+00> : vector<2x8xf32>
    %51 = tpu.matmul %50, %42, %cst_25 {dimension_numbers = #tpu.dot_dimension_numbers<[1], [0], [0], [1], [0, 0, 1, 1], [], []>} : vector<2x128xf32>, vector<128x8xf32>, vector<2x8xf32> -> vector<2x8xf32>
    %52 = vector.extract_strided_slice %51 {offsets = [0, 0], sizes = [1, 8], strides = [1, 1]} : vector<2x8xf32> to vector<1x8xf32>
    %cst_26 = arith.constant 3.125000e-02 : f32
    %53 = vector.broadcast %cst_26 : f32 to vector<1x8xf32>
    %54 = arith.mulf %52, %53 : vector<1x8xf32>
    %55 = vector.extract_strided_slice %51 {offsets = [1, 0], sizes = [1, 8], strides = [1, 1]} : vector<2x8xf32> to vector<1x8xf32>
    %cst_27 = arith.constant 3.125000e-02 : f32
    %56 = vector.broadcast %cst_27 : f32 to vector<1x8xf32>
    %57 = arith.mulf %55, %56 : vector<1x8xf32>
    %58 = arith.mulf %54, %54 : vector<1x8xf32>
    %59 = arith.subf %57, %58 : vector<1x8xf32>
    %cst_28 = arith.constant 9.99999974E-6 : f32
    %60 = vector.broadcast %cst_28 : f32 to vector<1x8xf32>
    %61 = arith.addf %59, %60 : vector<1x8xf32>
    %62 = math.rsqrt %61 : vector<1x8xf32>
    %63 = arith.mulf %54, %62 : vector<1x8xf32>
    %cst_29 = arith.constant 0.000000e+00 : f32
    %64 = vector.broadcast %cst_29 : f32 to vector<1x8xf32>
    %65 = arith.subf %64, %63 : vector<1x8xf32>
    %66 = tpu.concatenate %62, %65 in 0 : vector<1x8xf32>, vector<1x8xf32> -> vector<2x8xf32>
    %cst_30 = arith.constant dense<0.000000e+00> : vector<2x128xf32>
    %67 = tpu.matmul %66, %43, %cst_30 {dimension_numbers = #tpu.dot_dimension_numbers<[1], [0], [0], [1], [0, 0, 1, 1], [], []>} : vector<2x8xf32>, vector<8x128xf32>, vector<2x128xf32> -> vector<2x128xf32>
    %68 = vector.extract_strided_slice %67 {offsets = [0, 0], sizes = [1, 128], strides = [1, 1]} : vector<2x128xf32> to vector<1x128xf32>
    %69 = vector.broadcast %68 : vector<1x128xf32> to vector<2x128xf32>
    %70 = arith.mulf %41, %69 : vector<2x128xf32>
    %71 = vector.extract_strided_slice %67 {offsets = [1, 0], sizes = [1, 128], strides = [1, 1]} : vector<2x128xf32> to vector<1x128xf32>
    %72 = arith.addf %71, %44 : vector<1x128xf32>
    %73 = vector.broadcast %72 : vector<1x128xf32> to vector<2x128xf32>
    %74 = arith.addf %70, %73 : vector<2x128xf32>
    %cst_31 = arith.constant 0.000000e+00 : f32
    %75 = vector.broadcast %cst_31 : f32 to vector<2x128xf32>
    %76 = arith.maximumf %74, %75 : vector<2x128xf32>
    %77 = arith.truncf %76 : vector<2x128xf32> to vector<2x128xbf16>
    %c0_32 = arith.constant 0 : index
    %c0_33 = arith.constant 0 : index
    %78 = vector.load %arg5[%c0_32, %c0_33] : memref<128x64xbf16, #tpu.memory_space<vmem>>, vector<128x64xbf16>
    %cst_34 = arith.constant dense<0.000000e+00> : vector<2x64xf32>
    %79 = tpu.matmul %77, %78, %cst_34 {dimension_numbers = #tpu.dot_dimension_numbers<[1], [0], [0], [1], [0, 0, 1, 1], [], []>} : vector<2x128xbf16>, vector<128x64xbf16>, vector<2x64xf32> -> vector<2x64xf32>
    %c0_35 = arith.constant 0 : index
    %c0_36 = arith.constant 0 : index
    %80 = vector.load %arg6[%c0_35, %c0_36] : memref<81x64xf32, #tpu.memory_space<vmem>>, vector<64x16xf32>
    %c64 = arith.constant 64 : index
    %c0_37 = arith.constant 0 : index
    %81 = vector.load %arg6[%c64, %c0_37] : memref<81x64xf32, #tpu.memory_space<vmem>>, vector<16x64xf32>
    %c80 = arith.constant 80 : index
    %c0_38 = arith.constant 0 : index
    %82 = vector.load %arg6[%c80, %c0_38] : memref<81x64xf32, #tpu.memory_space<vmem>>, vector<1x64xf32>
    %cst_39 = arith.constant dense<0.000000e+00> : vector<64xf32>
    %83 = vector.multi_reduction <add>, %79, %cst_39 [0] : vector<2x64xf32> to vector<64xf32>
    %84 = vector.shape_cast %83 : vector<64xf32> to vector<1x64xf32>
    %85 = arith.mulf %79, %79 : vector<2x64xf32>
    %cst_40 = arith.constant dense<0.000000e+00> : vector<64xf32>
    %86 = vector.multi_reduction <add>, %85, %cst_40 [0] : vector<2x64xf32> to vector<64xf32>
    %87 = vector.shape_cast %86 : vector<64xf32> to vector<1x64xf32>
    %88 = tpu.concatenate %84, %87 in 0 : vector<1x64xf32>, vector<1x64xf32> -> vector<2x64xf32>
    %cst_41 = arith.constant dense<0.000000e+00> : vector<2x16xf32>
    %89 = tpu.matmul %88, %80, %cst_41 {dimension_numbers = #tpu.dot_dimension_numbers<[1], [0], [0], [1], [0, 0, 1, 1], [], []>} : vector<2x64xf32>, vector<64x16xf32>, vector<2x16xf32> -> vector<2x16xf32>
    %90 = vector.extract_strided_slice %89 {offsets = [0, 0], sizes = [1, 16], strides = [1, 1]} : vector<2x16xf32> to vector<1x16xf32>
    %cst_42 = arith.constant 1.250000e-01 : f32
    %91 = vector.broadcast %cst_42 : f32 to vector<1x16xf32>
    %92 = arith.mulf %90, %91 : vector<1x16xf32>
    %93 = vector.extract_strided_slice %89 {offsets = [1, 0], sizes = [1, 16], strides = [1, 1]} : vector<2x16xf32> to vector<1x16xf32>
    %cst_43 = arith.constant 1.250000e-01 : f32
    %94 = vector.broadcast %cst_43 : f32 to vector<1x16xf32>
    %95 = arith.mulf %93, %94 : vector<1x16xf32>
    %96 = arith.mulf %92, %92 : vector<1x16xf32>
    %97 = arith.subf %95, %96 : vector<1x16xf32>
    %cst_44 = arith.constant 9.99999974E-6 : f32
    %98 = vector.broadcast %cst_44 : f32 to vector<1x16xf32>
    %99 = arith.addf %97, %98 : vector<1x16xf32>
    %100 = math.rsqrt %99 : vector<1x16xf32>
    %101 = arith.mulf %92, %100 : vector<1x16xf32>
    %cst_45 = arith.constant 0.000000e+00 : f32
    %102 = vector.broadcast %cst_45 : f32 to vector<1x16xf32>
    %103 = arith.subf %102, %101 : vector<1x16xf32>
    %104 = tpu.concatenate %100, %103 in 0 : vector<1x16xf32>, vector<1x16xf32> -> vector<2x16xf32>
    %cst_46 = arith.constant dense<0.000000e+00> : vector<2x64xf32>
    %105 = tpu.matmul %104, %81, %cst_46 {dimension_numbers = #tpu.dot_dimension_numbers<[1], [0], [0], [1], [0, 0, 1, 1], [], []>} : vector<2x16xf32>, vector<16x64xf32>, vector<2x64xf32> -> vector<2x64xf32>
    %106 = vector.extract_strided_slice %105 {offsets = [0, 0], sizes = [1, 64], strides = [1, 1]} : vector<2x64xf32> to vector<1x64xf32>
    %107 = vector.broadcast %106 : vector<1x64xf32> to vector<2x64xf32>
    %108 = arith.mulf %79, %107 : vector<2x64xf32>
    %109 = vector.extract_strided_slice %105 {offsets = [1, 0], sizes = [1, 64], strides = [1, 1]} : vector<2x64xf32> to vector<1x64xf32>
    %110 = arith.addf %109, %82 : vector<1x64xf32>
    %111 = vector.broadcast %110 : vector<1x64xf32> to vector<2x64xf32>
    %112 = arith.addf %108, %111 : vector<2x64xf32>
    %cst_47 = arith.constant 0.000000e+00 : f32
    %113 = vector.broadcast %cst_47 : f32 to vector<2x64xf32>
    %114 = arith.maximumf %112, %113 : vector<2x64xf32>
    %115 = arith.truncf %114 : vector<2x64xf32> to vector<2x64xbf16>
    %c0_48 = arith.constant 0 : index
    %c0_49 = arith.constant 0 : index
    %116 = vector.load %arg7[%c0_48, %c0_49] : memref<96x192xbf16, #tpu.memory_space<vmem>>, vector<64x192xbf16>
    %cst_50 = arith.constant dense<0.000000e+00> : vector<2x192xf32>
    %117 = tpu.matmul %115, %116, %cst_50 {dimension_numbers = #tpu.dot_dimension_numbers<[1], [0], [0], [1], [0, 0, 1, 1], [], []>} : vector<2x64xbf16>, vector<64x192xbf16>, vector<2x192xf32> -> vector<2x192xf32>
    %c0_51 = arith.constant 0 : index
    %c0_52 = arith.constant 0 : index
    %118 = vector.load %arg8[%c0_51, %c0_52] : memref<2x192xf32, #tpu.memory_space<vmem>>, vector<1x192xf32>
    %119 = vector.broadcast %118 : vector<1x192xf32> to vector<2x192xf32>
    %120 = arith.addf %117, %119 : vector<2x192xf32>
    %c64_53 = arith.constant 64 : index
    %c0_54 = arith.constant 0 : index
    %121 = vector.load %arg7[%c64_53, %c0_54] : memref<96x192xbf16, #tpu.memory_space<vmem>>, vector<32x96xbf16>
    %c0_55 = arith.constant 0 : index
    %c0_56 = arith.constant 0 : index
    %122 = vector.load %arg8[%c0_55, %c0_56] : memref<2x192xf32, #tpu.memory_space<vmem>>, vector<2x192xf32>
    %123 = vector.extract_strided_slice %122 {offsets = [1, 0], sizes = [1, 96], strides = [1, 1]} : vector<2x192xf32> to vector<1x96xf32>
    %124 = vector.extract_strided_slice %120 {offsets = [0, 0], sizes = [2, 96], strides = [1, 1]} : vector<2x192xf32> to vector<2x96xf32>
    %125 = vector.extract_strided_slice %124 {offsets = [0, 0], sizes = [2, 64], strides = [1, 1]} : vector<2x96xf32> to vector<2x64xf32>
    %126 = vector.extract_strided_slice %123 {offsets = [0, 0], sizes = [1, 64], strides = [1, 1]} : vector<1x96xf32> to vector<1x64xf32>
    %127 = vector.broadcast %126 : vector<1x64xf32> to vector<2x64xf32>
    %128 = arith.addf %125, %127 : vector<2x64xf32>
    %129 = arith.negf %128 : vector<2x64xf32>
    %130 = math.exp %129 : vector<2x64xf32>
    %cst_57 = arith.constant 1.000000e+00 : f32
    %131 = vector.broadcast %cst_57 : f32 to vector<2x64xf32>
    %132 = arith.addf %131, %130 : vector<2x64xf32>
    %133 = arith.divf %131, %132 : vector<2x64xf32>
    %134 = vector.extract_strided_slice %133 {offsets = [0, 0], sizes = [2, 32], strides = [1, 1]} : vector<2x64xf32> to vector<2x32xf32>
    %135 = vector.extract_strided_slice %133 {offsets = [0, 32], sizes = [2, 32], strides = [1, 1]} : vector<2x64xf32> to vector<2x32xf32>
    %136 = vector.extract_strided_slice %124 {offsets = [0, 64], sizes = [2, 32], strides = [1, 1]} : vector<2x96xf32> to vector<2x32xf32>
    %137 = vector.extract_strided_slice %123 {offsets = [0, 64], sizes = [1, 32], strides = [1, 1]} : vector<1x96xf32> to vector<1x32xf32>
    %138 = vector.broadcast %137 : vector<1x32xf32> to vector<2x32xf32>
    %139 = arith.mulf %134, %138 : vector<2x32xf32>
    %140 = arith.addf %136, %139 : vector<2x32xf32>
    %141 = math.tanh %140 : vector<2x32xf32>
    %cst_58 = arith.constant 1.000000e+00 : f32
    %142 = vector.broadcast %cst_58 : f32 to vector<2x32xf32>
    %143 = arith.subf %142, %135 : vector<2x32xf32>
    %144 = arith.mulf %143, %141 : vector<2x32xf32>
    %145 = arith.truncf %144 : vector<2x32xf32> to vector<2x32xbf16>
    %cst_59 = arith.constant dense<0.000000e+00> : vector<2x96xf32>
    %146 = tpu.matmul %145, %121, %cst_59 {dimension_numbers = #tpu.dot_dimension_numbers<[1], [0], [0], [1], [0, 0, 1, 1], [], []>} : vector<2x32xbf16>, vector<32x96xbf16>, vector<2x96xf32> -> vector<2x96xf32>
    %147 = vector.broadcast %123 : vector<1x96xf32> to vector<2x96xf32>
    %148 = arith.addf %146, %147 : vector<2x96xf32>
    %149 = vector.extract_strided_slice %120 {offsets = [0, 96], sizes = [2, 96], strides = [1, 1]} : vector<2x192xf32> to vector<2x96xf32>
    %150 = vector.extract_strided_slice %149 {offsets = [0, 0], sizes = [2, 64], strides = [1, 1]} : vector<2x96xf32> to vector<2x64xf32>
    %151 = vector.extract_strided_slice %148 {offsets = [0, 0], sizes = [2, 64], strides = [1, 1]} : vector<2x96xf32> to vector<2x64xf32>
    %152 = arith.addf %150, %151 : vector<2x64xf32>
    %153 = arith.negf %152 : vector<2x64xf32>
    %154 = math.exp %153 : vector<2x64xf32>
    %cst_60 = arith.constant 1.000000e+00 : f32
    %155 = vector.broadcast %cst_60 : f32 to vector<2x64xf32>
    %156 = arith.addf %155, %154 : vector<2x64xf32>
    %157 = arith.divf %155, %156 : vector<2x64xf32>
    %158 = vector.extract_strided_slice %157 {offsets = [0, 0], sizes = [2, 32], strides = [1, 1]} : vector<2x64xf32> to vector<2x32xf32>
    %159 = vector.extract_strided_slice %157 {offsets = [0, 32], sizes = [2, 32], strides = [1, 1]} : vector<2x64xf32> to vector<2x32xf32>
    %160 = vector.extract_strided_slice %149 {offsets = [0, 64], sizes = [2, 32], strides = [1, 1]} : vector<2x96xf32> to vector<2x32xf32>
    %161 = vector.extract_strided_slice %148 {offsets = [0, 64], sizes = [2, 32], strides = [1, 1]} : vector<2x96xf32> to vector<2x32xf32>
    %162 = arith.mulf %158, %161 : vector<2x32xf32>
    %163 = arith.addf %160, %162 : vector<2x32xf32>
    %164 = math.tanh %163 : vector<2x32xf32>
    %cst_61 = arith.constant 1.000000e+00 : f32
    %165 = vector.broadcast %cst_61 : f32 to vector<2x32xf32>
    %166 = arith.subf %165, %159 : vector<2x32xf32>
    %167 = arith.mulf %166, %164 : vector<2x32xf32>
    %168 = arith.mulf %159, %144 : vector<2x32xf32>
    %169 = arith.addf %167, %168 : vector<2x32xf32>
    %170 = arith.truncf %169 : vector<2x32xf32> to vector<2x32xbf16>
    %c0_62 = arith.constant 0 : index
    %c0_63 = arith.constant 0 : index
    %171 = vector.load %arg9[%c0_62, %c0_63] : memref<64x64xbf16, #tpu.memory_space<vmem>>, vector<32x32xbf16>
    %cst_64 = arith.constant dense<0.000000e+00> : vector<2x32xf32>
    %172 = tpu.matmul %170, %171, %cst_64 {dimension_numbers = #tpu.dot_dimension_numbers<[1], [0], [0], [1], [0, 0, 1, 1], [], []>} : vector<2x32xbf16>, vector<32x32xbf16>, vector<2x32xf32> -> vector<2x32xf32>
    %cst_65 = arith.constant dense<0xFF800000> : vector<2xf32>
    %173 = vector.multi_reduction <maximumf>, %172, %cst_65 [1] : vector<2x32xf32> to vector<2xf32>
    %174 = vector.shape_cast %173 : vector<2xf32> to vector<2x1xf32>
    %175 = vector.broadcast %174 : vector<2x1xf32> to vector<2x32xf32>
    %176 = arith.subf %172, %175 : vector<2x32xf32>
    %177 = math.exp %176 : vector<2x32xf32>
    %178 = arith.truncf %177 : vector<2x32xf32> to vector<2x32xbf16>
    %c32 = arith.constant 32 : index
    %c0_66 = arith.constant 0 : index
    %179 = vector.load %arg9[%c32, %c0_66] : memref<64x64xbf16, #tpu.memory_space<vmem>>, vector<32x64xbf16>
    %cst_67 = arith.constant dense<0.000000e+00> : vector<2x64xf32>
    %180 = tpu.matmul %178, %179, %cst_67 {dimension_numbers = #tpu.dot_dimension_numbers<[1], [0], [0], [1], [0, 0, 1, 1], [], []>} : vector<2x32xbf16>, vector<32x64xbf16>, vector<2x64xf32> -> vector<2x64xf32>
    %181 = vector.extract_strided_slice %180 {offsets = [0, 0], sizes = [2, 32], strides = [1, 1]} : vector<2x64xf32> to vector<2x32xf32>
    %182 = vector.extract_strided_slice %180 {offsets = [0, 32], sizes = [2, 32], strides = [1, 1]} : vector<2x64xf32> to vector<2x32xf32>
    %183 = tpu.reciprocal %182 {approx = true} : vector<2x32xf32> -> vector<2x32xf32>
    %184 = arith.mulf %181, %183 : vector<2x32xf32>
    %c0_68 = arith.constant 0 : index
    %c0_69 = arith.constant 0 : index
    %185 = vector.load %arg10[%c0_68, %c0_69] : memref<2x32xf32, #tpu.memory_space<vmem>>, vector<2x32xf32>
    tpu.vector_store %arg10[%c0_68, %c0_69], %184 {strides = array<i32>} : memref<2x32xf32, #tpu.memory_space<vmem>>, vector<2x32xf32>,
    return
  }
}

</mosaic_0001>

<llo_original>
// kernel: _gst_pallas.1
$region0: #{_gst_pallas.1}
  #allocation0 [shape = 'u32[]', space=smem, size = 0x4, offset = 0x4, fixed_abs, tag = 'smem constant byte address 0x4 - core index']
  #allocation1 [shape = 'u32[72,128]{1,0:T(1,128)}', space=vmem, size = 0x9000, scoped, tag = 'internal scratch']
  %s0 = inlined_call_operand.vmem [shape: f32[2,256], index: 0, kind: input, shape index: {}]
  %s1 = inlined_call_operand.hbm [shape: bf16[256,256], index: 1, kind: input, shape index: {}]
  %s2 = inlined_call_operand.hbm [shape: f32[265,256], index: 2, kind: input, shape index: {}]
  %s3 = inlined_call_operand.hbm [shape: bf16[256,128], index: 3, kind: input, shape index: {}]
  %s4 = inlined_call_operand.vmem [shape: f32[137,128], index: 4, kind: input, shape index: {}]
  %s5 = inlined_call_operand.vmem [shape: bf16[128,64], index: 5, kind: input, shape index: {}]
  %s6 = inlined_call_operand.vmem [shape: f32[81,64], index: 6, kind: input, shape index: {}]
  %s7 = inlined_call_operand.hbm [shape: bf16[96,192], index: 7, kind: input, shape index: {}]
  %s8 = inlined_call_operand.vmem [shape: f32[2,192], index: 8, kind: input, shape index: {}]
  %s9 = inlined_call_operand.vmem [shape: bf16[64,64], index: 9, kind: input, shape index: {}]
  %s10 = inlined_call_operand.hbm [shape: f32[2,32], index: 10, kind: output, shape index: {}]
  %s11 = sld [smem:[#allocation0]]
  $region66: #{_gst_pallas.1} parent=0
    _
  %s13 = ssub.s32 1, %s11
  %s14 = scalar_select 0, %s13, %s11
  $region1: #{_gst_pallas.1} parent=0
    #allocation2 [shape = 'u8[131072]{0}', space=vmem, size = 0x20000, scoped, tag = 'input window, operand 1, single buffered']
    #allocation3 [shape = 's32[1]{0}', space=sflag, size = 0x4, scoped, tag = 'scoped memory for _gst_pallas.1']
    #allocation4 [shape = 's32[1]{0}', space=sflag, size = 0x4, scoped, tag = 'scoped memory for _gst_pallas.1']
    #allocation5 [shape = 'u8[278528]{0}', space=vmem, size = 0x44000, scoped, tag = 'input window, operand 2, single buffered']
    #allocation6 [shape = 's32[1]{0}', space=sflag, size = 0x4, scoped, tag = 'scoped memory for _gst_pallas.1']
    #allocation7 [shape = 'u8[65536]{0}', space=vmem, size = 0x10000, scoped, tag = 'input window, operand 3, single buffered']
    #allocation8 [shape = 'u8[49152]{0}', space=vmem, size = 0xc000, scoped, tag = 'input window, operand 7, single buffered']
    #allocation9 [shape = 's32[1]{0}', space=sflag, size = 0x4, scoped, tag = 'scoped memory for _gst_pallas.1']
    #allocation10 [shape = 'u8[1024]{0}', space=vmem, size = 0x400, scoped, tag = 'output window, operand 0, single buffered']
    %15 = vsyncpa [#allocation3], 0
    %16 = vsyncpa [#allocation6], 0
    %17 = vsyncpa [#allocation9], 0
    %18 = vsyncpa [#allocation4], 0
    // Predicated region
    $region2: #{_gst_pallas.1} parent=1 // pred_check
      _
    $region3: #{_gst_pallas.1} parent=1 // pred_check_branch
      %20 = sbr.rel (0) target = $region5
    $region4: #{_gst_pallas.1} parent=1 // pred_region
      _
    $region5: #{_gst_pallas.1} parent=1 // pred_fallthru
      _
    // Predicated region
    $region6: #{_gst_pallas.1} parent=1 // pred_check
      _
    $region7: #{_gst_pallas.1} parent=1 // pred_check_branch
      %22 = sbr.rel (0) target = $region9
    $region8: #{_gst_pallas.1} parent=1 // pred_region
      %24 = vsyncadd [#allocation3], 0
      %s25 = sshll.u32 %s1, 4
      %s26 = int_to_ptr.hbm [resolvable:$true] %s25
      %s27 = sshll.u32 [#allocation2], 4
      %s28 = int_to_ptr.vmem [resolvable:$true] %s27
      %33 = dma.hbm_to_vmem [thread:$0]  %s26, 4096, %s28, [#allocation3], 128, 128, 8
    $region9: #{_gst_pallas.1} parent=1 // pred_fallthru
      _
    // Predicated region
    $region10: #{_gst_pallas.1} parent=1 // pred_check
      _
    $region11: #{_gst_pallas.1} parent=1 // pred_check_branch
      %35 = sbr.rel (0) target = $region13
    $region12: #{_gst_pallas.1} parent=1 // pred_region
      %37 = vsyncadd [#allocation6], 0
      %s38 = sshll.u32 %s2, 4
      %s39 = int_to_ptr.hbm [resolvable:$true] %s38
      %s40 = sshll.u32 [#allocation5], 4
      %s41 = int_to_ptr.vmem [resolvable:$true] %s40
      %46 = dma.hbm_to_vmem [thread:$0]  %s39, 8704, %s41, [#allocation6], 256, 256, 16
    $region13: #{_gst_pallas.1} parent=1 // pred_fallthru
      _
    // Predicated region
    $region14: #{_gst_pallas.1} parent=1 // pred_check
      _
    $region15: #{_gst_pallas.1} parent=1 // pred_check_branch
      %48 = sbr.rel (0) target = $region17
    $region16: #{_gst_pallas.1} parent=1 // pred_region
      %50 = vsyncadd [#allocation6], 0
      %s51 = sshll.u32 %s3, 4
      %s52 = int_to_ptr.hbm [resolvable:$true] %s51
      %s53 = sshll.u32 [#allocation7], 4
      %s54 = int_to_ptr.vmem [resolvable:$true] %s53
      %59 = dma.hbm_to_vmem [thread:$0]  %s52, 2048, %s54, [#allocation6], 64, 64, 4
    $region17: #{_gst_pallas.1} parent=1 // pred_fallthru
      _
    // Predicated region
    $region18: #{_gst_pallas.1} parent=1 // pred_check
      _
    $region19: #{_gst_pallas.1} parent=1 // pred_check_branch
      %61 = sbr.rel (0) target = $region21
    $region20: #{_gst_pallas.1} parent=1 // pred_region
      _
    $region21: #{_gst_pallas.1} parent=1 // pred_fallthru
      _
    // Predicated region
    $region22: #{_gst_pallas.1} parent=1 // pred_check
      _
    $region23: #{_gst_pallas.1} parent=1 // pred_check_branch
      %63 = sbr.rel (0) target = $region25
    $region24: #{_gst_pallas.1} parent=1 // pred_region
      _
    $region25: #{_gst_pallas.1} parent=1 // pred_fallthru
      _
    // Predicated region
    $region26: #{_gst_pallas.1} parent=1 // pred_check
      _
    $region27: #{_gst_pallas.1} parent=1 // pred_check_branch
      %65 = sbr.rel (0) target = $region29
    $region28: #{_gst_pallas.1} parent=1 // pred_region
      _
    $region29: #{_gst_pallas.1} parent=1 // pred_fallthru
      _
    // Predicated region
    $region30: #{_gst_pallas.1} parent=1 // pred_check
      _
    $region31: #{_gst_pallas.1} parent=1 // pred_check_branch
      %67 = sbr.rel (0) target = $region33
    $region32: #{_gst_pallas.1} parent=1 // pred_region
      %69 = vsyncadd [#allocation9], 0
      %s70 = sshll.u32 %s7, 4
      %s71 = int_to_ptr.hbm [resolvable:$true] %s70
      %s72 = sshll.u32 [#allocation8], 4
      %s73 = int_to_ptr.vmem [resolvable:$true] %s72
      %78 = dma.hbm_to_vmem [thread:$0]  %s71, 1536, %s73, [#allocation9], 128, 128, 8
    $region33: #{_gst_pallas.1} parent=1 // pred_fallthru
      _
    // Predicated region
    $region34: #{_gst_pallas.1} parent=1 // pred_check
      _
    $region35: #{_gst_pallas.1} parent=1 // pred_check_branch
      %80 = sbr.rel (0) target = $region37
    $region36: #{_gst_pallas.1} parent=1 // pred_region
      _
    $region37: #{_gst_pallas.1} parent=1 // pred_fallthru
      _
    // Predicated region
    $region38: #{_gst_pallas.1} parent=1 // pred_check
      _
    $region39: #{_gst_pallas.1} parent=1 // pred_check_branch
      %82 = sbr.rel (0) target = $region41
    $region40: #{_gst_pallas.1} parent=1 // pred_region
      _
    $region41: #{_gst_pallas.1} parent=1 // pred_fallthru
      _
    // Predicated region
    $region42: #{_gst_pallas.1} parent=1 // pred_check
      _
    $region43: #{_gst_pallas.1} parent=1 // pred_check_branch
      %84 = sbr.rel (0) target = $region45
    $region44: #{_gst_pallas.1} parent=1 // pred_region
      %86 = dma.done [#allocation3], 4096
    $region45: #{_gst_pallas.1} parent=1 // pred_fallthru
      _
    // Predicated region
    $region46: #{_gst_pallas.1} parent=1 // pred_check
      _
    $region47: #{_gst_pallas.1} parent=1 // pred_check_branch
      %88 = sbr.rel (0) target = $region49
    $region48: #{_gst_pallas.1} parent=1 // pred_region
      %90 = dma.done [#allocation6], 8704
    $region49: #{_gst_pallas.1} parent=1 // pred_fallthru
      _
    // Predicated region
    $region50: #{_gst_pallas.1} parent=1 // pred_check
      _
    $region51: #{_gst_pallas.1} parent=1 // pred_check_branch
      %92 = sbr.rel (0) target = $region53
    $region52: #{_gst_pallas.1} parent=1 // pred_region
      %94 = dma.done [#allocation6], 2048
    $region53: #{_gst_pallas.1} parent=1 // pred_fallthru
      _
    // Predicated region
    $region54: #{_gst_pallas.1} parent=1 // pred_check
      _
    $region55: #{_gst_pallas.1} parent=1 // pred_check_branch
      %96 = sbr.rel (0) target = $region57
    $region56: #{_gst_pallas.1} parent=1 // pred_region
      %98 = dma.done [#allocation9], 1536
    $region57: #{_gst_pallas.1} parent=1 // pred_fallthru
      _
    %v100 = vld [vmem:[%s0] sm:$0xf]
    %102 = vst [vmem:[#allocation1] ss:$4 sm:$0xff] %v100
    %v103 = vld.sshfl [vmem:[#allocation1] sm:$0xff pattern:$0x73625140]
    %v104 = vld.sshfl [vmem:[#allocation1 + $0x8] sm:$0xff pattern:$0x73625140]
    %v107 = vpack.c.bf16 %v103, %v103
    %v108 = vpack.c.bf16 %v104, %v104
    %v109 = vld [vmem:[#allocation2] sm:$0xff]
    %v110 = vld [vmem:[#allocation2 + $0x8] sm:$0xff]
    %v111 = vld [vmem:[#allocation2 + $0x10] sm:$0xff]
    %v112 = vld [vmem:[#allocation2 + $0x18] sm:$0xff]
    %v113 = vld [vmem:[#allocation2 + $0x20] sm:$0xff]
    %v114 = vld [vmem:[#allocation2 + $0x28] sm:$0xff]
    %v115 = vld [vmem:[#allocation2 + $0x30] sm:$0xff]
    %v116 = vld [vmem:[#allocation2 + $0x38] sm:$0xff]
    %v117 = vld [vmem:[#allocation2 + $0x40] sm:$0xff]
    %v118 = vld [vmem:[#allocation2 + $0x48] sm:$0xff]
    %v119 = vld [vmem:[#allocation2 + $0x50] sm:$0xff]
    %v120 = vld [vmem:[#allocation2 + $0x58] sm:$0xff]
    %v121 = vld [vmem:[#allocation2 + $0x60] sm:$0xff]
    %v122 = vld [vmem:[#allocation2 + $0x68] sm:$0xff]
    %v123 = vld [vmem:[#allocation2 + $0x70] sm:$0xff]
    %v124 = vld [vmem:[#allocation2 + $0x78] sm:$0xff]
    %v125 = vld [vmem:[#allocation2 + $0x80] sm:$0xff]
    %v126 = vld [vmem:[#allocation2 + $0x88] sm:$0xff]
    %v127 = vld [vmem:[#allocation2 + $0x90] sm:$0xff]
    %v128 = vld [vmem:[#allocation2 + $0x98] sm:$0xff]
    %v129 = vld [vmem:[#allocation2 + $0xa0] sm:$0xff]
    %v130 = vld [vmem:[#allocation2 + $0xa8] sm:$0xff]
    %v131 = vld [vmem:[#allocation2 + $0xb0] sm:$0xff]
    %v132 = vld [vmem:[#allocation2 + $0xb8] sm:$0xff]
    %v133 = vld [vmem:[#allocation2 + $0xc0] sm:$0xff]
    %v134 = vld [vmem:[#allocation2 + $0xc8] sm:$0xff]
    %v135 = vld [vmem:[#allocation2 + $0xd0] sm:$0xff]
    %v136 = vld [vmem:[#allocation2 + $0xd8] sm:$0xff]
    %v137 = vld [vmem:[#allocation2 + $0xe0] sm:$0xff]
    %v138 = vld [vmem:[#allocation2 + $0xe8] sm:$0xff]
    %v139 = vld [vmem:[#allocation2 + $0xf0] sm:$0xff]
    %v140 = vld [vmem:[#allocation2 + $0xf8] sm:$0xff]
    %v173 = vunpack.c.l.b16 %v109
    %v174 = vunpack.c.h.b16 %v109
    %v175 = vunpack.c.l.b16 %v110
    %v176 = vunpack.c.h.b16 %v110
    %v177 = vunpack.c.l.b16 %v111
    %v178 = vunpack.c.h.b16 %v111
    %v179 = vunpack.c.l.b16 %v112
    %v180 = vunpack.c.h.b16 %v112
    %v181 = vunpack.c.l.b16 %v113
    %v182 = vunpack.c.h.b16 %v113
    %v183 = vunpack.c.l.b16 %v114
    %v184 = vunpack.c.h.b16 %v114
    %v185 = vunpack.c.l.b16 %v115
    %v186 = vunpack.c.h.b16 %v115
    %v187 = vunpack.c.l.b16 %v116
    %v188 = vunpack.c.h.b16 %v116
    %v189 = vunpack.c.l.b16 %v117
    %v190 = vunpack.c.h.b16 %v117
    %v191 = vunpack.c.l.b16 %v118
    %v192 = vunpack.c.h.b16 %v118
    %v193 = vunpack.c.l.b16 %v119
    %v194 = vunpack.c.h.b16 %v119
    %v195 = vunpack.c.l.b16 %v120
    %v196 = vunpack.c.h.b16 %v120
    %v197 = vunpack.c.l.b16 %v121
    %v198 = vunpack.c.h.b16 %v121
    %v199 = vunpack.c.l.b16 %v122
    %v200 = vunpack.c.h.b16 %v122
    %v201 = vunpack.c.l.b16 %v123
    %v202 = vunpack.c.h.b16 %v123
    %v203 = vunpack.c.l.b16 %v124
    %v204 = vunpack.c.h.b16 %v124
    %v205 = vunpack.c.l.b16 %v125
    %v206 = vunpack.c.h.b16 %v125
    %v207 = vunpack.c.l.b16 %v126
    %v208 = vunpack.c.h.b16 %v126
    %v209 = vunpack.c.l.b16 %v127
    %v210 = vunpack.c.h.b16 %v127
    %v211 = vunpack.c.l.b16 %v128
    %v212 = vunpack.c.h.b16 %v128
    %v213 = vunpack.c.l.b16 %v129
    %v214 = vunpack.c.h.b16 %v129
    %v215 = vunpack.c.l.b16 %v130
    %v216 = vunpack.c.h.b16 %v130
    %v217 = vunpack.c.l.b16 %v131
    %v218 = vunpack.c.h.b16 %v131
    %v219 = vunpack.c.l.b16 %v132
    %v220 = vunpack.c.h.b16 %v132
    %v221 = vunpack.c.l.b16 %v133
    %v222 = vunpack.c.h.b16 %v133
    %v223 = vunpack.c.l.b16 %v134
    %v224 = vunpack.c.h.b16 %v134
    %v225 = vunpack.c.l.b16 %v135
    %v226 = vunpack.c.h.b16 %v135
    %v227 = vunpack.c.l.b16 %v136
    %v228 = vunpack.c.h.b16 %v136
    %v229 = vunpack.c.l.b16 %v137
    %v230 = vunpack.c.h.b16 %v137
    %v231 = vunpack.c.l.b16 %v138
    %v232 = vunpack.c.h.b16 %v138
    %v233 = vunpack.c.l.b16 %v139
    %v234 = vunpack.c.h.b16 %v139
    %v235 = vunpack.c.l.b16 %v140
    %v236 = vunpack.c.h.b16 %v140
    %v237 = vpack.c.b16 %v175, %v173
    %v238 = vpack.c.b16 %v176, %v174
    %v239 = vpack.c.b16 %v179, %v177
    %v240 = vpack.c.b16 %v180, %v178
    %v241 = vpack.c.b16 %v183, %v181
    %v242 = vpack.c.b16 %v184, %v182
    %v243 = vpack.c.b16 %v187, %v185
    %v244 = vpack.c.b16 %v188, %v186
    %v245 = vpack.c.b16 %v191, %v189
    %v246 = vpack.c.b16 %v192, %v190
    %v247 = vpack.c.b16 %v195, %v193
    %v248 = vpack.c.b16 %v196, %v194
    %v249 = vpack.c.b16 %v199, %v197
    %v250 = vpack.c.b16 %v200, %v198
    %v251 = vpack.c.b16 %v203, %v201
    %v252 = vpack.c.b16 %v204, %v202
    %v253 = vpack.c.b16 %v207, %v205
    %v254 = vpack.c.b16 %v208, %v206
    %v255 = vpack.c.b16 %v211, %v209
    %v256 = vpack.c.b16 %v212, %v210
    %v257 = vpack.c.b16 %v215, %v213
    %v258 = vpack.c.b16 %v216, %v214
    %v259 = vpack.c.b16 %v219, %v217
    %v260 = vpack.c.b16 %v220, %v218
    %v261 = vpack.c.b16 %v223, %v221
    %v262 = vpack.c.b16 %v224, %v222
    %v263 = vpack.c.b16 %v227, %v225
    %v264 = vpack.c.b16 %v228, %v226
    %v265 = vpack.c.b16 %v231, %v229
    %v266 = vpack.c.b16 %v232, %v230
    %v267 = vpack.c.b16 %v235, %v233
    %v268 = vpack.c.b16 %v236, %v234
    %301 = vmatpush.bf16.msra.mxu0 %v251
    %302 = vmatpush.bf16.msra.mxu0 %v249
    %303 = vmatpush.bf16.msra.mxu0 %v247
    %304 = vmatpush.bf16.msra.mxu0 %v245
    %305 = vmatpush.bf16.msra.mxu0 %v243
    %306 = vmatpush.bf16.msra.mxu0 %v241
    %307 = vmatpush.bf16.msra.mxu0 %v239
    %308 = vmatpush.bf16.msra.mxu0 %v237
    %309 = vmatmul.bf16.gmra.mxu0 %v107
    %v310 = vpop.f32.mrf.mxu0
    %v311 = vadd.f32 0.0, %v310
    %v312 = vpop.f32.mrf.mxu0
    %313 = vdwg.mxu0
    %314 = vmatpush.bf16.msra.mxu0 %v267
    %315 = vmatpush.bf16.msra.mxu0 %v265
    %316 = vmatpush.bf16.msra.mxu0 %v263
    %317 = vmatpush.bf16.msra.mxu0 %v261
    %318 = vmatpush.bf16.msra.mxu0 %v259
    %319 = vmatpush.bf16.msra.mxu0 %v257
    %320 = vmatpush.bf16.msra.mxu0 %v255
    %321 = vmatpush.bf16.msra.mxu0 %v253
    %322 = vmatmul.bf16.gmra.mxu0 %v108
    %v323 = vpop.f32.mrf.mxu0
    %v324 = vadd.f32 %v311, %v323
    %v325 = vpop.f32.mrf.mxu0
    %326 = vdwg.mxu0
    %327 = vmatpush.bf16.msra.mxu0 %v252
    %328 = vmatpush.bf16.msra.mxu0 %v250
    %329 = vmatpush.bf16.msra.mxu0 %v248
    %330 = vmatpush.bf16.msra.mxu0 %v246
    %331 = vmatpush.bf16.msra.mxu0 %v244
    %332 = vmatpush.bf16.msra.mxu0 %v242
    %333 = vmatpush.bf16.msra.mxu0 %v240
    %334 = vmatpush.bf16.msra.mxu0 %v238
    %335 = vmatmul.bf16.gmra.mxu0 %v107
    %v336 = vpop.f32.mrf.mxu0
    %v337 = vadd.f32 0.0, %v336
    %v338 = vpop.f32.mrf.mxu0
    %339 = vdwg.mxu0
    %340 = vmatpush.bf16.msra.mxu0 %v268
    %341 = vmatpush.bf16.msra.mxu0 %v266
    %342 = vmatpush.bf16.msra.mxu0 %v264
    %343 = vmatpush.bf16.msra.mxu0 %v262
    %344 = vmatpush.bf16.msra.mxu0 %v260
    %345 = vmatpush.bf16.msra.mxu0 %v258
    %346 = vmatpush.bf16.msra.mxu0 %v256
    %347 = vmatpush.bf16.msra.mxu0 %v254
    %348 = vmatmul.bf16.gmra.mxu0 %v108
    %v349 = vpop.f32.mrf.mxu0
    %v350 = vadd.f32 %v337, %v349
    %v351 = vpop.f32.mrf.mxu0
    %352 = vdwg.mxu0
    %v353 = vld [vmem:[#allocation5] sm:$0xff]
    %v354 = vld [vmem:[#allocation5 + $0x10] sm:$0xff]
    %v355 = vld [vmem:[#allocation5 + $0x20] sm:$0xff]
    %v356 = vld [vmem:[#allocation5 + $0x30] sm:$0xff]
    %v357 = vld [vmem:[#allocation5 + $0x40] sm:$0xff]
    %v358 = vld [vmem:[#allocation5 + $0x50] sm:$0xff]
    %v359 = vld [vmem:[#allocation5 + $0x60] sm:$0xff]
    %v360 = vld [vmem:[#allocation5 + $0x70] sm:$0xff]
    %v361 = vld [vmem:[#allocation5 + $0x80] sm:$0xff]
    %v362 = vld [vmem:[#allocation5 + $0x90] sm:$0xff]
    %v363 = vld [vmem:[#allocation5 + $0xa0] sm:$0xff]
    %v364 = vld [vmem:[#allocation5 + $0xb0] sm:$0xff]
    %v365 = vld [vmem:[#allocation5 + $0xc0] sm:$0xff]
    %v366 = vld [vmem:[#allocation5 + $0xd0] sm:$0xff]
    %v367 = vld [vmem:[#allocation5 + $0xe0] sm:$0xff]
    %v368 = vld [vmem:[#allocation5 + $0xf0] sm:$0xff]
    %v369 = vld [vmem:[#allocation5 + $0x100] sm:$0xff]
    %v370 = vld [vmem:[#allocation5 + $0x110] sm:$0xff]
    %v371 = vld [vmem:[#allocation5 + $0x120] sm:$0xff]
    %v372 = vld [vmem:[#allocation5 + $0x130] sm:$0xff]
    %v373 = vld [vmem:[#allocation5 + $0x140] sm:$0xff]
    %v374 = vld [vmem:[#allocation5 + $0x150] sm:$0xff]
    %v375 = vld [vmem:[#allocation5 + $0x160] sm:$0xff]
    %v376 = vld [vmem:[#allocation5 + $0x170] sm:$0xff]
    %v377 = vld [vmem:[#allocation5 + $0x180] sm:$0xff]
    %v378 = vld [vmem:[#allocation5 + $0x190] sm:$0xff]
    %v379 = vld [vmem:[#allocation5 + $0x1a0] sm:$0xff]
    %v380 = vld [vmem:[#allocation5 + $0x1b0] sm:$0xff]
    %v381 = vld [vmem:[#allocation5 + $0x1c0] sm:$0xff]
    %v382 = vld [vmem:[#allocation5 + $0x1d0] sm:$0xff]
    %v383 = vld [vmem:[#allocation5 + $0x1e0] sm:$0xff]
    %v384 = vld [vmem:[#allocation5 + $0x1f0] sm:$0xff]
    %v385 = vld [vmem:[#allocation5 + $0x200] sm:$0xff]
    %v386 = vld [vmem:[#allocation5 + $0x208] sm:$0xff]
    %s387 = scalar_lea.vmem [#allocation5], 528
    %v388 = vld [vmem:[%s387] ss:$8 sm:$0x3]
    %vm389 = vcmask 1041408
    %v390 = vsel %vm389, %v324, 0.0
    %v391 = vrot.slane %v390, 4
    %v392 = vadd.f32 %v390, %v391
    %v393 = vrot.slane %v392, 2
    %v394 = vadd.f32 %v392, %v393
    %v395 = vrot.slane %v394, 1
    %v396 = vadd.f32 %v394, %v395
    %v397 = vsel %vm389, %v350, 0.0
    %v398 = vrot.slane %v397, 4
    %v399 = vadd.f32 %v397, %v398
    %v400 = vrot.slane %v399, 2
    %v401 = vadd.f32 %v399, %v400
    %v402 = vrot.slane %v401, 1
    %v403 = vadd.f32 %v401, %v402
    %v404 = vmul.f32 %v324, %v324
    %v405 = vmul.f32 %v350, %v350
    %v406 = vsel %vm389, %v404, 0.0
    %v407 = vrot.slane %v406, 4
    %v408 = vadd.f32 %v406, %v407
    %v409 = vrot.slane %v408, 2
    %v410 = vadd.f32 %v408, %v409
    %v411 = vrot.slane %v410, 1
    %v412 = vadd.f32 %v410, %v411
    %v413 = vsel %vm389, %v405, 0.0
    %v414 = vrot.slane %v413, 4
    %v415 = vadd.f32 %v413, %v414
    %v416 = vrot.slane %v415, 2
    %v417 = vadd.f32 %v415, %v416
    %v418 = vrot.slane %v417, 1
    %v419 = vadd.f32 %v417, %v418
    %vm420 = vcmask 1040384
    %v421 = vsel %vm420, %v396, %v412
    %v422 = vsel %vm420, %v403, %v419
    %423 = vmatpush.msra.mxu0 %v368
    %424 = vmatpush.msra.mxu0 %v367
    %425 = vmatpush.msra.mxu0 %v366
    %426 = vmatpush.msra.mxu0 %v365
    %427 = vmatpush.msra.mxu0 %v364
    %428 = vmatpush.msra.mxu0 %v363
    %429 = vmatpush.msra.mxu0 %v362
    %430 = vmatpush.msra.mxu0 %v361
    %431 = vmatpush.msra.mxu0 %v360
    %432 = vmatpush.msra.mxu0 %v359
    %433 = vmatpush.msra.mxu0 %v358
    %434 = vmatpush.msra.mxu0 %v357
    %435 = vmatpush.msra.mxu0 %v356
    %436 = vmatpush.msra.mxu0 %v355
    %437 = vmatpush.msra.mxu0 %v354
    %438 = vmatpush.msra.mxu0 %v353
    %439 = vmatmul.f32.gmra.mxu0 %v421
    %v440 = vpop.f32.mrf.mxu0
    %v441 = vadd.f32 0.0, %v440
    %442 = vdwg.mxu0
    %443 = vmatpush.msra.mxu0 %v384
    %444 = vmatpush.msra.mxu0 %v383
    %445 = vmatpush.msra.mxu0 %v382
    %446 = vmatpush.msra.mxu0 %v381
    %447 = vmatpush.msra.mxu0 %v380
    %448 = vmatpush.msra.mxu0 %v379
    %449 = vmatpush.msra.mxu0 %v378
    %450 = vmatpush.msra.mxu0 %v377
    %451 = vmatpush.msra.mxu0 %v376
    %452 = vmatpush.msra.mxu0 %v375
    %453 = vmatpush.msra.mxu0 %v374
    %454 = vmatpush.msra.mxu0 %v373
    %455 = vmatpush.msra.mxu0 %v372
    %456 = vmatpush.msra.mxu0 %v371
    %457 = vmatpush.msra.mxu0 %v370
    %458 = vmatpush.msra.mxu0 %v369
    %459 = vmatmul.f32.gmra.mxu0 %v422
    %v460 = vpop.f32.mrf.mxu0
    %v461 = vadd.f32 %v441, %v460
    %462 = vdwg.mxu0
    %v463 = vmul.f32 %v461, 0.0078125
    %v464 = vmul.f32 %v463, %v463
    %v466 = vrot.slane %v464, 7
    %v468 = vsub.f32 %v463, %v466
    %v469 = vadd.f32 %v468, 1e-05
    %v470 = vrsqrt.pop %v469
    %v471 = vmul.f32 %v470, %v469
    %v472 = vmul.f32 %v471, %v470
    %v473 = vmul.f32 0.5, %v472
    %v474 = vsub.f32 1.5, %v473
    %v475 = vmul.f32 %v470, %v474
    %vm476 = vweird.f32 %v469
    %vm477 = vweird.f32 %v470
    %vm478 = vmor %vm476, %vm477
    %v479 = vsel %vm478, %v470, %v475
    %v481 = vrot.slane %v479, 1
    %v483 = vmul.f32 %v463, %v481
    %v484 = vsub.f32 0.0, %v483
    %v486 = vrot.slane %v484, 7
    %v488 = vsel %vm420, %v481, %v486
    %vm489 = vcmask 64512
    %v491 = vsel %vm489, %v488, 0
    %493 = vmatpush.msra.mxu0 0.0
    %494 = vmatpush.msra.mxu0 0.0
    %495 = vmatpush.msra.mxu0 0.0
    %496 = vmatpush.msra.mxu0 0.0
    %497 = vmatpush.msra.mxu0 0.0
    %498 = vmatpush.msra.mxu0 0.0
    %499 = vmatpush.msra.mxu0 0.0
    %500 = vmatpush.msra.mxu0 0.0
    %501 = vmatpush.msra.mxu0 0.0
    %502 = vmatpush.msra.mxu0 0.0
    %503 = vmatpush.msra.mxu0 0.0
    %504 = vmatpush.msra.mxu0 0.0
    %505 = vmatpush.msra.mxu0 0.0
    %506 = vmatpush.msra.mxu0 0.0
    %507 = vmatpush.msra.mxu0 0.0
    %508 = vmatpush.msra.mxu0 %v385
    %509 = vmatmul.f32.gmra.mxu0 %v491
    %v510 = vpop.f32.mrf.mxu0
    %v511 = vadd.f32 0.0, %v510
    %512 = vdwg.mxu0
    %513 = vmatpush.msra.mxu0 0.0
    %514 = vmatpush.msra.mxu0 0.0
    %515 = vmatpush.msra.mxu0 0.0
    %516 = vmatpush.msra.mxu0 0.0
    %517 = vmatpush.msra.mxu0 0.0
    %518 = vmatpush.msra.mxu0 0.0
    %519 = vmatpush.msra.mxu0 0.0
    %520 = vmatpush.msra.mxu0 0.0
    %521 = vmatpush.msra.mxu0 0.0
    %522 = vmatpush.msra.mxu0 0.0
    %523 = vmatpush.msra.mxu0 0.0
    %524 = vmatpush.msra.mxu0 0.0
    %525 = vmatpush.msra.mxu0 0.0
    %526 = vmatpush.msra.mxu0 0.0
    %527 = vmatpush.msra.mxu0 0.0
    %528 = vmatpush.msra.mxu0 %v386
    %529 = vmatmul.f32.gmra.mxu0 %v491
    %v530 = vpop.f32.mrf.mxu0
    %v531 = vadd.f32 0.0, %v530
    %532 = vdwg.mxu0
    %v533 = vperm.slane %v511, 0
    %v534 = vperm.slane %v531, 0
    %v535 = vmul.f32 %v324, %v533
    %v536 = vmul.f32 %v350, %v534
    %v538 = vperm.slane %v388, 0
    %v539 = vperm.slane %v388, 1
    %v542 = vadd.f32 %v511, %v538
    %v543 = vadd.f32 %v531, %v539
    %v544 = vperm.slane %v542, 1
    %v545 = vperm.slane %v543, 1
    %v546 = vadd.f32 %v535, %v544
    %v547 = vadd.f32 %v536, %v545
    %v548 = vmax.f32 %v546, 0.0
    %v549 = vmax.f32 %v547, 0.0
    %v550 = vpack.c.bf16 %v548, %v548
    %v551 = vpack.c.bf16 %v549, %v549
    %v552 = vld [vmem:[#allocation7] sm:$0xf]
    %v553 = vld [vmem:[#allocation7 + $0x4] sm:$0xf]
    %v554 = vld [vmem:[#allocation7 + $0x8] sm:$0xf]
    %v555 = vld [vmem:[#allocation7 + $0xc] sm:$0xf]
    %v556 = vld [vmem:[#allocation7 + $0x10] sm:$0xf]
    %v557 = vld [vmem:[#allocation7 + $0x14] sm:$0xf]
    %v558 = vld [vmem:[#allocation7 + $0x18] sm:$0xf]
    %v559 = vld [vmem:[#allocation7 + $0x1c] sm:$0xf]
    %v560 = vld [vmem:[#allocation7 + $0x20] sm:$0xf]
    %v561 = vld [vmem:[#allocation7 + $0x24] sm:$0xf]
    %v562 = vld [vmem:[#allocation7 + $0x28] sm:$0xf]
    %v563 = vld [vmem:[#allocation7 + $0x2c] sm:$0xf]
    %v564 = vld [vmem:[#allocation7 + $0x30] sm:$0xf]
    %v565 = vld [vmem:[#allocation7 + $0x34] sm:$0xf]
    %v566 = vld [vmem:[#allocation7 + $0x38] sm:$0xf]
    %v567 = vld [vmem:[#allocation7 + $0x3c] sm:$0xf]
    %v568 = vld [vmem:[#allocation7 + $0x40] sm:$0xf]
    %v569 = vld [vmem:[#allocation7 + $0x44] sm:$0xf]
    %v570 = vld [vmem:[#allocation7 + $0x48] sm:$0xf]
    %v571 = vld [vmem:[#allocation7 + $0x4c] sm:$0xf]
    %v572 = vld [vmem:[#allocation7 + $0x50] sm:$0xf]
    %v573 = vld [vmem:[#allocation7 + $0x54] sm:$0xf]
    %v574 = vld [vmem:[#allocation7 + $0x58] sm:$0xf]
    %v575 = vld [vmem:[#allocation7 + $0x5c] sm:$0xf]
    %v576 = vld [vmem:[#allocation7 + $0x60] sm:$0xf]
    %v577 = vld [vmem:[#allocation7 + $0x64] sm:$0xf]
    %v578 = vld [vmem:[#allocation7 + $0x68] sm:$0xf]
    %v579 = vld [vmem:[#allocation7 + $0x6c] sm:$0xf]
    %v580 = vld [vmem:[#allocation7 + $0x70] sm:$0xf]
    %v581 = vld [vmem:[#allocation7 + $0x74] sm:$0xf]
    %v582 = vld [vmem:[#allocation7 + $0x78] sm:$0xf]
    %v583 = vld [vmem:[#allocation7 + $0x7c] sm:$0xf]
    %v616 = vunpack.c.l.b16 %v552
    %v617 = vunpack.c.l.b16 %v553
    %v618 = vunpack.c.l.b16 %v554
    %v619 = vunpack.c.l.b16 %v555
    %v620 = vunpack.c.l.b16 %v556
    %v621 = vunpack.c.l.b16 %v557
    %v622 = vunpack.c.l.b16 %v558
    %v623 = vunpack.c.l.b16 %v559
    %v624 = vunpack.c.l.b16 %v560
    %v625 = vunpack.c.l.b16 %v561
    %v626 = vunpack.c.l.b16 %v562
    %v627 = vunpack.c.l.b16 %v563
    %v628 = vunpack.c.l.b16 %v564
    %v629 = vunpack.c.l.b16 %v565
    %v630 = vunpack.c.l.b16 %v566
    %v631 = vunpack.c.l.b16 %v567
    %v632 = vunpack.c.l.b16 %v568
    %v633 = vunpack.c.l.b16 %v569
    %v634 = vunpack.c.l.b16 %v570
    %v635 = vunpack.c.l.b16 %v571
    %v636 = vunpack.c.l.b16 %v572
    %v637 = vunpack.c.l.b16 %v573
    %v638 = vunpack.c.l.b16 %v574
    %v639 = vunpack.c.l.b16 %v575
    %v640 = vunpack.c.l.b16 %v576
    %v641 = vunpack.c.l.b16 %v577
    %v642 = vunpack.c.l.b16 %v578
    %v643 = vunpack.c.l.b16 %v579
    %v644 = vunpack.c.l.b16 %v580
    %v645 = vunpack.c.l.b16 %v581
    %v646 = vunpack.c.l.b16 %v582
    %v647 = vunpack.c.l.b16 %v583
    %v648 = vpack.c.b16 %v617, %v616
    %v649 = vpack.c.b16 %v619, %v618
    %v650 = vpack.c.b16 %v621, %v620
    %v651 = vpack.c.b16 %v623, %v622
    %v652 = vpack.c.b16 %v625, %v624
    %v653 = vpack.c.b16 %v627, %v626
    %v654 = vpack.c.b16 %v629, %v628
    %v655 = vpack.c.b16 %v631, %v630
    %v656 = vpack.c.b16 %v633, %v632
    %v657 = vpack.c.b16 %v635, %v634
    %v658 = vpack.c.b16 %v637, %v636
    %v659 = vpack.c.b16 %v639, %v638
    %v660 = vpack.c.b16 %v641, %v640
    %v661 = vpack.c.b16 %v643, %v642
    %v662 = vpack.c.b16 %v645, %v644
    %v663 = vpack.c.b16 %v647, %v646
    %680 = vmatpush.bf16.msra.mxu0 %v655
    %681 = vmatpush.bf16.msra.mxu0 %v654
    %682 = vmatpush.bf16.msra.mxu0 %v653
    %683 = vmatpush.bf16.msra.mxu0 %v652
    %684 = vmatpush.bf16.msra.mxu0 %v651
    %685 = vmatpush.bf16.msra.mxu0 %v650
    %686 = vmatpush.bf16.msra.mxu0 %v649
    %687 = vmatpush.bf16.msra.mxu0 %v648
    %688 = vmatmul.bf16.gmra.mxu0 %v550
    %v689 = vpop.f32.mrf.mxu0
    %v690 = vadd.f32 0.0, %v689
    %v691 = vpop.f32.mrf.mxu0
    %692 = vdwg.mxu0
    %693 = vmatpush.bf16.msra.mxu0 %v663
    %694 = vmatpush.bf16.msra.mxu0 %v662
    %695 = vmatpush.bf16.msra.mxu0 %v661
    %696 = vmatpush.bf16.msra.mxu0 %v660
    %697 = vmatpush.bf16.msra.mxu0 %v659
    %698 = vmatpush.bf16.msra.mxu0 %v658
    %699 = vmatpush.bf16.msra.mxu0 %v657
    %700 = vmatpush.bf16.msra.mxu0 %v656
    %701 = vmatmul.bf16.gmra.mxu0 %v551
    %v702 = vpop.f32.mrf.mxu0
    %v703 = vadd.f32 %v690, %v702
    %v704 = vpop.f32.mrf.mxu0
    %705 = vdwg.mxu0
    %v706 = vld [vmem:[%s4] sm:$0xff]
    %v707 = vld [vmem:[%s4 + $0x8] sm:$0xff]
    %v708 = vld [vmem:[%s4 + $0x10] sm:$0xff]
    %v709 = vld [vmem:[%s4 + $0x18] sm:$0xff]
    %v710 = vld [vmem:[%s4 + $0x20] sm:$0xff]
    %v711 = vld [vmem:[%s4 + $0x28] sm:$0xff]
    %v712 = vld [vmem:[%s4 + $0x30] sm:$0xff]
    %v713 = vld [vmem:[%s4 + $0x38] sm:$0xff]
    %v714 = vld [vmem:[%s4 + $0x40] sm:$0xff]
    %v715 = vld [vmem:[%s4 + $0x48] sm:$0xff]
    %v716 = vld [vmem:[%s4 + $0x50] sm:$0xff]
    %v717 = vld [vmem:[%s4 + $0x58] sm:$0xff]
    %v718 = vld [vmem:[%s4 + $0x60] sm:$0xff]
    %v719 = vld [vmem:[%s4 + $0x68] sm:$0xff]
    %v720 = vld [vmem:[%s4 + $0x70] sm:$0xff]
    %v721 = vld [vmem:[%s4 + $0x78] sm:$0xff]
    %v722 = vld [vmem:[%s4 + $0x80] sm:$0xff]
    %v723 = vld [vmem:[%s4 + $0x88] sm:$0x1]
    %v724 = vsel %vm389, %v703, 0.0
    %v725 = vrot.slane %v724, 4
    %v726 = vadd.f32 %v724, %v725
    %v727 = vrot.slane %v726, 2
    %v728 = vadd.f32 %v726, %v727
    %v729 = vrot.slane %v728, 1
    %v730 = vadd.f32 %v728, %v729
    %v731 = vmul.f32 %v703, %v703
    %v732 = vsel %vm389, %v731, 0.0
    %v733 = vrot.slane %v732, 4
    %v734 = vadd.f32 %v732, %v733
    %v735 = vrot.slane %v734, 2
    %v736 = vadd.f32 %v734, %v735
    %v737 = vrot.slane %v736, 1
    %v738 = vadd.f32 %v736, %v737
    %v739 = vsel %vm420, %v730, %v738
    %740 = vmatpush.msra.mxu0 %v721
    %741 = vmatpush.msra.mxu0 %v720
    %742 = vmatpush.msra.mxu0 %v719
    %743 = vmatpush.msra.mxu0 %v718
    %744 = vmatpush.msra.mxu0 %v717
    %745 = vmatpush.msra.mxu0 %v716
    %746 = vmatpush.msra.mxu0 %v715
    %747 = vmatpush.msra.mxu0 %v714
    %748 = vmatpush.msra.mxu0 %v713
    %749 = vmatpush.msra.mxu0 %v712
    %750 = vmatpush.msra.mxu0 %v711
    %751 = vmatpush.msra.mxu0 %v710
    %752 = vmatpush.msra.mxu0 %v709
    %753 = vmatpush.msra.mxu0 %v708
    %754 = vmatpush.msra.mxu0 %v707
    %755 = vmatpush.msra.mxu0 %v706
    %756 = vmatmul.f32.gmra.mxu0 %v739
    %v757 = vpop.f32.mrf.mxu0
    %v758 = vadd.f32 0.0, %v757
    %759 = vdwg.mxu0
    %v760 = vmul.f32 %v758, 0.03125
    %v761 = vmul.f32 %v760, %v760
    %v763 = vrot.slane %v761, 7
    %v765 = vsub.f32 %v760, %v763
    %v766 = vadd.f32 %v765, 1e-05
    %v767 = vrsqrt.pop %v766
    %v768 = vmul.f32 %v767, %v766
    %v769 = vmul.f32 %v768, %v767
    %v770 = vmul.f32 0.5, %v769
    %v771 = vsub.f32 1.5, %v770
    %v772 = vmul.f32 %v767, %v771
    %vm773 = vweird.f32 %v766
    %vm774 = vweird.f32 %v767
    %vm775 = vmor %vm773, %vm774
    %v776 = vsel %vm775, %v767, %v772
    %v778 = vrot.slane %v776, 1
    %v780 = vmul.f32 %v760, %v778
    %v781 = vsub.f32 0.0, %v780
    %v783 = vrot.slane %v781, 7
    %v785 = vsel %vm420, %v778, %v783
    %v787 = vsel %vm489, %v785, 0
    %789 = vmatpush.msra.mxu0 0.0
    %790 = vmatpush.msra.mxu0 0.0
    %791 = vmatpush.msra.mxu0 0.0
    %792 = vmatpush.msra.mxu0 0.0
    %793 = vmatpush.msra.mxu0 0.0
    %794 = vmatpush.msra.mxu0 0.0
    %795 = vmatpush.msra.mxu0 0.0
    %796 = vmatpush.msra.mxu0 0.0
    %797 = vmatpush.msra.mxu0 0.0
    %798 = vmatpush.msra.mxu0 0.0
    %799 = vmatpush.msra.mxu0 0.0
    %800 = vmatpush.msra.mxu0 0.0
    %801 = vmatpush.msra.mxu0 0.0
    %802 = vmatpush.msra.mxu0 0.0
    %803 = vmatpush.msra.mxu0 0.0
    %804 = vmatpush.msra.mxu0 %v722
    %805 = vmatmul.f32.gmra.mxu0 %v787
    %v806 = vpop.f32.mrf.mxu0
    %v807 = vadd.f32 0.0, %v806
    %808 = vdwg.mxu0
    %v809 = vperm.slane %v807, 0
    %v810 = vmul.f32 %v703, %v809
    %v812 = vrot.slane %v723, 7
    %v814 = vadd.f32 %v807, %v812
    %v815 = vperm.slane %v814, 1
    %v816 = vadd.f32 %v810, %v815
    %v817 = vmax.f32 %v816, 0.0
    %v818 = vpack.c.bf16 %v817, %v817
    %v819 = vld [vmem:[%s5] sm:$0xf]
    %v820 = vld [vmem:[%s5 + $0x4] sm:$0xf]
    %v821 = vld [vmem:[%s5 + $0x8] sm:$0xf]
    %v822 = vld [vmem:[%s5 + $0xc] sm:$0xf]
    %v823 = vld [vmem:[%s5 + $0x10] sm:$0xf]
    %v824 = vld [vmem:[%s5 + $0x14] sm:$0xf]
    %v825 = vld [vmem:[%s5 + $0x18] sm:$0xf]
    %v826 = vld [vmem:[%s5 + $0x1c] sm:$0xf]
    %v827 = vld [vmem:[%s5 + $0x20] sm:$0xf]
    %v828 = vld [vmem:[%s5 + $0x24] sm:$0xf]
    %v829 = vld [vmem:[%s5 + $0x28] sm:$0xf]
    %v830 = vld [vmem:[%s5 + $0x2c] sm:$0xf]
    %v831 = vld [vmem:[%s5 + $0x30] sm:$0xf]
    %v832 = vld [vmem:[%s5 + $0x34] sm:$0xf]
    %v833 = vld [vmem:[%s5 + $0x38] sm:$0xf]
    %v834 = vld [vmem:[%s5 + $0x3c] sm:$0xf]
    %v851 = vunpack.c.l.b16 %v819
    %v852 = vunpack.c.l.b16 %v820
    %v853 = vunpack.c.l.b16 %v821
    %v854 = vunpack.c.l.b16 %v822
    %v855 = vunpack.c.l.b16 %v823
    %v856 = vunpack.c.l.b16 %v824
    %v857 = vunpack.c.l.b16 %v825
    %v858 = vunpack.c.l.b16 %v826
    %v859 = vunpack.c.l.b16 %v827
    %v860 = vunpack.c.l.b16 %v828
    %v861 = vunpack.c.l.b16 %v829
    %v862 = vunpack.c.l.b16 %v830
    %v863 = vunpack.c.l.b16 %v831
    %v864 = vunpack.c.l.b16 %v832
    %v865 = vunpack.c.l.b16 %v833
    %v866 = vunpack.c.l.b16 %v834
    %v867 = vpack.c.b16 %v852, %v851
    %v868 = vpack.c.b16 %v854, %v853
    %v869 = vpack.c.b16 %v856, %v855
    %v870 = vpack.c.b16 %v858, %v857
    %v871 = vpack.c.b16 %v860, %v859
    %v872 = vpack.c.b16 %v862, %v861
    %v873 = vpack.c.b16 %v864, %v863
    %v874 = vpack.c.b16 %v866, %v865
    %883 = vmatpush.bf16.msra.mxu0 %v874
    %884 = vmatpush.bf16.msra.mxu0 %v873
    %885 = vmatpush.bf16.msra.mxu0 %v872
    %886 = vmatpush.bf16.msra.mxu0 %v871
    %887 = vmatpush.bf16.msra.mxu0 %v870
    %888 = vmatpush.bf16.msra.mxu0 %v869
    %889 = vmatpush.bf16.msra.mxu0 %v868
    %890 = vmatpush.bf16.msra.mxu0 %v867
    %891 = vmatmul.bf16.gmra.mxu0 %v818
    %v892 = vpop.f32.mrf.mxu0
    %v893 = vadd.f32 0.0, %v892
    %v894 = vpop.f32.mrf.mxu0
    %895 = vdwg.mxu0
    %v896 = vld [vmem:[%s6] sm:$0xff]
    %v897 = vld [vmem:[%s6 + $0x8] sm:$0xff]
    %v898 = vld [vmem:[%s6 + $0x10] sm:$0xff]
    %v899 = vld [vmem:[%s6 + $0x18] sm:$0xff]
    %v900 = vld [vmem:[%s6 + $0x20] sm:$0xff]
    %v901 = vld [vmem:[%s6 + $0x28] sm:$0xff]
    %v902 = vld [vmem:[%s6 + $0x30] sm:$0xff]
    %v903 = vld [vmem:[%s6 + $0x38] sm:$0xff]
    %v904 = vld [vmem:[%s6 + $0x40] sm:$0xff]
    %v905 = vld [vmem:[%s6 + $0x48] sm:$0xff]
    %v906 = vld [vmem:[%s6 + $0x50] sm:$0x1]
    %vm907 = vcmask 517120
    %v908 = vsel %vm907, %v893, 0.0
    %v909 = vrot.slane %v908, 4
    %v910 = vadd.f32 %v908, %v909
    %v911 = vrot.slane %v910, 2
    %v912 = vadd.f32 %v910, %v911
    %v913 = vrot.slane %v912, 1
    %v914 = vadd.f32 %v912, %v913
    %v915 = vmul.f32 %v893, %v893
    %v916 = vsel %vm907, %v915, 0.0
    %v917 = vrot.slane %v916, 4
    %v918 = vadd.f32 %v916, %v917
    %v919 = vrot.slane %v918, 2
    %v920 = vadd.f32 %v918, %v919
    %v921 = vrot.slane %v920, 1
    %v922 = vadd.f32 %v920, %v921
    %v923 = vsel %vm420, %v914, %v922
    %vm924 = vcmask 523264
    %v926 = vsel %vm924, %v923, 0
    %928 = vmatpush.msra.mxu0 0.0
    %929 = vmatpush.msra.mxu0 0.0
    %930 = vmatpush.msra.mxu0 0.0
    %931 = vmatpush.msra.mxu0 0.0
    %932 = vmatpush.msra.mxu0 0.0
    %933 = vmatpush.msra.mxu0 0.0
    %934 = vmatpush.msra.mxu0 0.0
    %935 = vmatpush.msra.mxu0 0.0
    %936 = vmatpush.msra.mxu0 %v903
    %937 = vmatpush.msra.mxu0 %v902
    %938 = vmatpush.msra.mxu0 %v901
    %939 = vmatpush.msra.mxu0 %v900
    %940 = vmatpush.msra.mxu0 %v899
    %941 = vmatpush.msra.mxu0 %v898
    %942 = vmatpush.msra.mxu0 %v897
    %943 = vmatpush.msra.mxu0 %v896
    %944 = vmatmul.f32.gmra.mxu0 %v926
    %v945 = vpop.f32.mrf.mxu0
    %v946 = vadd.f32 0.0, %v945
    %947 = vdwg.mxu0
    %v948 = vmul.f32 %v946, 0.125
    %v949 = vmul.f32 %v948, %v948
    %v951 = vrot.slane %v949, 7
    %v953 = vsub.f32 %v948, %v951
    %v954 = vadd.f32 %v953, 1e-05
    %v955 = vrsqrt.pop %v954
    %v956 = vmul.f32 %v955, %v954
    %v957 = vmul.f32 %v956, %v955
    %v958 = vmul.f32 0.5, %v957
    %v959 = vsub.f32 1.5, %v958
    %v960 = vmul.f32 %v955, %v959
    %vm961 = vweird.f32 %v954
    %vm962 = vweird.f32 %v955
    %vm963 = vmor %vm961, %vm962
    %v964 = vsel %vm963, %v955, %v960
    %v966 = vrot.slane %v964, 1
    %v968 = vmul.f32 %v948, %v966
    %v969 = vsub.f32 0.0, %v968
    %v971 = vrot.slane %v969, 7
    %v973 = vsel %vm420, %v966, %v971
    %vm974 = vcmask 130048
    %v976 = vsel %vm974, %v973, 0
    %978 = vmatpush.msra.mxu0 0.0
    %979 = vmatpush.msra.mxu0 0.0
    %980 = vmatpush.msra.mxu0 0.0
    %981 = vmatpush.msra.mxu0 0.0
    %982 = vmatpush.msra.mxu0 0.0
    %983 = vmatpush.msra.mxu0 0.0
    %984 = vmatpush.msra.mxu0 0.0
    %985 = vmatpush.msra.mxu0 0.0
    %986 = vmatpush.msra.mxu0 0.0
    %987 = vmatpush.msra.mxu0 0.0
    %988 = vmatpush.msra.mxu0 0.0
    %989 = vmatpush.msra.mxu0 0.0
    %990 = vmatpush.msra.mxu0 0.0
    %991 = vmatpush.msra.mxu0 0.0
    %992 = vmatpush.msra.mxu0 %v905
    %993 = vmatpush.msra.mxu0 %v904
    %994 = vmatmul.f32.gmra.mxu0 %v976
    %v995 = vpop.f32.mrf.mxu0
    %v996 = vadd.f32 0.0, %v995
    %997 = vdwg.mxu0
    %v998 = vperm.slane %v996, 0
    %v999 = vmul.f32 %v893, %v998
    %v1001 = vrot.slane %v906, 7
    %v1003 = vadd.f32 %v996, %v1001
    %v1004 = vperm.slane %v1003, 1
    %v1005 = vadd.f32 %v999, %v1004
    %v1006 = vmax.f32 %v1005, 0.0
    %v1007 = vpack.c.bf16 %v1006, %v1006
    %v1008 = vld [vmem:[#allocation8] sm:$0xff]
    %v1009 = vld [vmem:[#allocation8 + $0x8] sm:$0xff]
    %v1010 = vld [vmem:[#allocation8 + $0x10] sm:$0xff]
    %v1011 = vld [vmem:[#allocation8 + $0x18] sm:$0xff]
    %v1012 = vld [vmem:[#allocation8 + $0x20] sm:$0xff]
    %v1013 = vld [vmem:[#allocation8 + $0x28] sm:$0xff]
    %v1014 = vld [vmem:[#allocation8 + $0x30] sm:$0xff]
    %v1015 = vld [vmem:[#allocation8 + $0x38] sm:$0xff]
    %v1016 = vld [vmem:[%s8] ss:$2 sm:$0x3]
    %v1018 = vperm.slane %v1016, 0
    %v1019 = vperm.slane %v1016, 1
    %v1030 = vunpack.c.l.b16 %v1008
    %v1031 = vunpack.c.h.b16 %v1008
    %v1032 = vunpack.c.l.b16 %v1009
    %v1033 = vunpack.c.h.b16 %v1009
    %v1034 = vunpack.c.l.b16 %v1010
    %v1035 = vunpack.c.h.b16 %v1010
    %v1036 = vunpack.c.l.b16 %v1011
    %v1037 = vunpack.c.h.b16 %v1011
    %v1038 = vunpack.c.l.b16 %v1012
    %v1039 = vunpack.c.h.b16 %v1012
    %v1040 = vunpack.c.l.b16 %v1013
    %v1041 = vunpack.c.h.b16 %v1013
    %v1042 = vunpack.c.l.b16 %v1014
    %v1043 = vunpack.c.h.b16 %v1014
    %v1044 = vunpack.c.l.b16 %v1015
    %v1045 = vunpack.c.h.b16 %v1015
    %v1046 = vpack.c.b16 %v1032, %v1030
    %v1047 = vpack.c.b16 %v1033, %v1031
    %v1048 = vpack.c.b16 %v1036, %v1034
    %v1049 = vpack.c.b16 %v1037, %v1035
    %v1050 = vpack.c.b16 %v1040, %v1038
    %v1051 = vpack.c.b16 %v1041, %v1039
    %v1052 = vpack.c.b16 %v1044, %v1042
    %v1053 = vpack.c.b16 %v1045, %v1043
    %v1063 = vsel %vm924, %v1007, 0
    %1065 = vmatpush.bf16.msra.mxu0 0
    %1066 = vmatpush.bf16.msra.mxu0 0
    %1067 = vmatpush.bf16.msra.mxu0 0
    %1068 = vmatpush.bf16.msra.mxu0 0
    %1069 = vmatpush.bf16.msra.mxu0 %v1052
    %1070 = vmatpush.bf16.msra.mxu0 %v1050
    %1071 = vmatpush.bf16.msra.mxu0 %v1048
    %1072 = vmatpush.bf16.msra.mxu0 %v1046
    %1073 = vmatmul.bf16.gmra.mxu0 %v1063
    %v1074 = vpop.f32.mrf.mxu0
    %v1075 = vadd.f32 %v1018, %v1074
    %v1076 = vpop.f32.mrf.mxu0
    %1077 = vdwg.mxu0
    %1078 = vmatpush.bf16.msra.mxu0 0
    %1079 = vmatpush.bf16.msra.mxu0 0
    %1080 = vmatpush.bf16.msra.mxu0 0
    %1081 = vmatpush.bf16.msra.mxu0 0
    %1082 = vmatpush.bf16.msra.mxu0 %v1053
    %1083 = vmatpush.bf16.msra.mxu0 %v1051
    %1084 = vmatpush.bf16.msra.mxu0 %v1049
    %1085 = vmatpush.bf16.msra.mxu0 %v1047
    %1086 = vmatmul.bf16.gmra.mxu0 %v1063
    %v1087 = vpop.f32.mrf.mxu0
    %v1088 = vadd.f32 %v1019, %v1087
    %v1089 = vpop.f32.mrf.mxu0
    %1090 = vdwg.mxu0
    %v1091 = vld [vmem:[#allocation8 + $0x40] sm:$0xf]
    %v1092 = vld [vmem:[#allocation8 + $0x48] sm:$0xf]
    %v1093 = vld [vmem:[#allocation8 + $0x50] sm:$0xf]
    %v1094 = vld [vmem:[#allocation8 + $0x58] sm:$0xf]
    %v1095 = vld [vmem:[%s8] sm:$0xf]
    %v1096 = vperm.slane %v1095, 1
    %v1097 = vadd.f32 %v1075, %v1096
    %v1098 = vxor.u32 %v1097, 2147483648
    %v1099 = vmul.f32 %v1098, 1.442695
    %v1100 = vpow.pop %v1099
    %v1101 = vadd.f32 %v1100, 1.0
    %v1102 = vrcp.pop %v1101
    %v1103 = vmul.f32 %v1101, %v1102
    %v1104 = vsub.f32 1.0, %v1103
    %v1105 = vmul.f32 %v1102, %v1104
    %v1106 = vadd.f32 %v1102, %v1105
    %vm1107 = vweird.f32 %v1101
    %vm1108 = vweird.f32 %v1102
    %vm1109 = vmor %vm1107, %vm1108
    %v1110 = vsel %vm1109, %v1102, %v1106
    %v1111 = vand.u32 2147483647, %v1101
    %vm1112 = vcmp.eq.f32.partialorder %v1111, 8.507059e+37
    %v1113 = vand.u32 %v1101, 2147483648
    %v1114 = vor.u32 1.1754944e-38, %v1113
    %v1115 = vsel %vm1112, %v1114, %v1110
    %v1116 = vmul.f32 1.0, %v1115
    %1118 = vrot.lane.b32.xlu0 %v1096, 64
    %v1119 = vpop.permute.xlu0 %1118
    %v1121 = vmul.f32 %v1116, %v1119
    %1123 = vrot.lane.b32.xlu0 %v1121, 64
    %v1124 = vpop.permute.xlu0 %1123
    %v1126 = vadd.f32 %v1075, %v1124
    %v1127 = vtanh.pop %v1126
    %v1128 = vsub.f32 1.0, %v1116
    %1130 = vrot.lane.b32.xlu0 %v1127, 96
    %v1131 = vpop.permute.xlu0 %1130
    %v1133 = vmul.f32 %v1128, %v1131
    %v1134 = vpack.c.bf16 %v1133, %v1133
    %1136 = vrot.lane.b32.xlu0 %v1134, 96
    %v1137 = vpop.permute.xlu0 %1136
    %v1142 = vunpack.c.l.b16 %v1091
    %v1143 = vunpack.c.l.b16 %v1092
    %v1144 = vunpack.c.l.b16 %v1093
    %v1145 = vunpack.c.l.b16 %v1094
    %v1146 = vpack.c.b16 %v1143, %v1142
    %v1147 = vpack.c.b16 %v1145, %v1144
    %vm1150 = vcmask 261120
    %v1152 = vsel %vm1150, %v1137, 0
    %1154 = vmatpush.bf16.msra.mxu0 0
    %1155 = vmatpush.bf16.msra.mxu0 0
    %1156 = vmatpush.bf16.msra.mxu0 0
    %1157 = vmatpush.bf16.msra.mxu0 0
    %1158 = vmatpush.bf16.msra.mxu0 0
    %1159 = vmatpush.bf16.msra.mxu0 0
    %1160 = vmatpush.bf16.msra.mxu0 %v1147
    %1161 = vmatpush.bf16.msra.mxu0 %v1146
    %1162 = vmatmul.bf16.gmra.mxu0 %v1152
    %v1163 = vpop.f32.mrf.mxu0
    %v1164 = vadd.f32 %v1096, %v1163
    %v1165 = vpop.f32.mrf.mxu0
    %1166 = vdwg.mxu0
    %1168 = vrot.lane.b32.xlu0 %v1164, 96
    %v1169 = vpop.permute.xlu0 %1168
    %v1171 = vadd.f32 %v1075, %v1169
    %v1172 = vadd.f32 %v1088, %v1169
    %v1173 = vxor.u32 %v1171, 2147483648
    %v1174 = vxor.u32 %v1172, 2147483648
    %v1175 = vmul.f32 %v1173, 1.442695
    %v1176 = vpow.pop %v1175
    %v1177 = vmul.f32 %v1174, 1.442695
    %v1178 = vpow.pop %v1177
    %v1179 = vadd.f32 %v1176, 1.0
    %v1180 = vadd.f32 %v1178, 1.0
    %v1181 = vrcp.pop %v1179
    %v1182 = vmul.f32 %v1179, %v1181
    %v1183 = vsub.f32 1.0, %v1182
    %v1184 = vmul.f32 %v1181, %v1183
    %v1185 = vadd.f32 %v1181, %v1184
    %vm1186 = vweird.f32 %v1179
    %vm1187 = vweird.f32 %v1181
    %vm1188 = vmor %vm1186, %vm1187
    %v1189 = vsel %vm1188, %v1181, %v1185
    %v1190 = vand.u32 2147483647, %v1179
    %vm1191 = vcmp.eq.f32.partialorder %v1190, 8.507059e+37
    %v1192 = vand.u32 %v1179, 2147483648
    %v1193 = vor.u32 1.1754944e-38, %v1192
    %v1194 = vsel %vm1191, %v1193, %v1189
    %v1195 = vmul.f32 1.0, %v1194
    %v1196 = vrcp.pop %v1180
    %v1197 = vmul.f32 %v1180, %v1196
    %v1198 = vsub.f32 1.0, %v1197
    %v1199 = vmul.f32 %v1196, %v1198
    %v1200 = vadd.f32 %v1196, %v1199
    %vm1201 = vweird.f32 %v1180
    %vm1202 = vweird.f32 %v1196
    %vm1203 = vmor %vm1201, %vm1202
    %v1204 = vsel %vm1203, %v1196, %v1200
    %v1205 = vand.u32 2147483647, %v1180
    %vm1206 = vcmp.eq.f32.partialorder %v1205, 8.507059e+37
    %v1207 = vand.u32 %v1180, 2147483648
    %v1208 = vor.u32 1.1754944e-38, %v1207
    %v1209 = vsel %vm1206, %v1208, %v1204
    %v1210 = vmul.f32 1.0, %v1209
    %1211 = vrot.lane.b32.xlu0 %v1164, 32
    %v1212 = vpop.permute.xlu0 %1211
    %v1214 = vmul.f32 %v1195, %v1212
    %1216 = vrot.lane.b32.xlu0 %v1214, 64
    %v1217 = vpop.permute.xlu0 %1216
    %v1219 = vadd.f32 %v1088, %v1217
    %v1220 = vtanh.pop %v1219
    %v1221 = vsub.f32 1.0, %v1210
    %1223 = vrot.lane.b32.xlu0 %v1220, 96
    %v1224 = vpop.permute.xlu0 %1223
    %v1226 = vmul.f32 %v1221, %v1224
    %1228 = vrot.lane.b32.xlu0 %v1133, 96
    %v1229 = vpop.permute.xlu0 %1228
    %v1231 = vmul.f32 %v1210, %v1229
    %v1232 = vadd.f32 %v1226, %v1231
    %v1233 = vpack.c.bf16 %v1232, %v1232
    %v1234 = vld [vmem:[%s9] sm:$0xf]
    %v1235 = vld [vmem:[%s9 + $0x4] sm:$0xf]
    %v1236 = vld [vmem:[%s9 + $0x8] sm:$0xf]
    %v1237 = vld [vmem:[%s9 + $0xc] sm:$0xf]
    %v1242 = vunpack.c.l.b16 %v1234
    %v1243 = vunpack.c.l.b16 %v1235
    %v1244 = vunpack.c.l.b16 %v1236
    %v1245 = vunpack.c.l.b16 %v1237
    %v1246 = vpack.c.b16 %v1243, %v1242
    %v1247 = vpack.c.b16 %v1245, %v1244
    %v1251 = vsel %vm1150, %v1233, 0
    %1253 = vmatpush.bf16.msra.mxu0 0
    %1254 = vmatpush.bf16.msra.mxu0 0
    %1255 = vmatpush.bf16.msra.mxu0 0
    %1256 = vmatpush.bf16.msra.mxu0 0
    %1257 = vmatpush.bf16.msra.mxu0 0
    %1258 = vmatpush.bf16.msra.mxu0 0
    %1259 = vmatpush.bf16.msra.mxu0 %v1247
    %1260 = vmatpush.bf16.msra.mxu0 %v1246
    %1261 = vmatmul.bf16.gmra.mxu0 %v1251
    %v1262 = vpop.f32.mrf.mxu0
    %v1263 = vadd.f32 0.0, %v1262
    %v1264 = vpop.f32.mrf.mxu0
    %1265 = vdwg.mxu0
    %vm1266 = vcmask 254976
    %v1267 = vsel %vm1266, %v1263, -inf
    %1268 = vmax.xlane.f32.xlu0 %v1267
    %v1269 = vpop.xlane.xlu0 %1268
    %v1270 = vsub.f32 %v1263, %v1269
    %v1271 = vmul.f32 %v1270, 1.442695
    %v1272 = vpow.pop %v1271
    %v1273 = vpack.c.bf16 %v1272, %v1272
    %v1274 = vld [vmem:[%s9 + $0x10] sm:$0xf]
    %v1275 = vld [vmem:[%s9 + $0x14] sm:$0xf]
    %v1276 = vld [vmem:[%s9 + $0x18] sm:$0xf]
    %v1277 = vld [vmem:[%s9 + $0x1c] sm:$0xf]
    %v1282 = vunpack.c.l.b16 %v1274
    %v1283 = vunpack.c.l.b16 %v1275
    %v1284 = vunpack.c.l.b16 %v1276
    %v1285 = vunpack.c.l.b16 %v1277
    %v1286 = vpack.c.b16 %v1283, %v1282
    %v1287 = vpack.c.b16 %v1285, %v1284
    %v1291 = vsel %vm1150, %v1273, 0
    %1293 = vmatpush.bf16.msra.mxu0 0
    %1294 = vmatpush.bf16.msra.mxu0 0
    %1295 = vmatpush.bf16.msra.mxu0 0
    %1296 = vmatpush.bf16.msra.mxu0 0
    %1297 = vmatpush.bf16.msra.mxu0 0
    %1298 = vmatpush.bf16.msra.mxu0 0
    %1299 = vmatpush.bf16.msra.mxu0 %v1287
    %1300 = vmatpush.bf16.msra.mxu0 %v1286
    %1301 = vmatmul.bf16.gmra.mxu0 %v1291
    %v1302 = vpop.f32.mrf.mxu0
    %v1303 = vadd.f32 0.0, %v1302
    %v1304 = vpop.f32.mrf.mxu0
    %1305 = vdwg.mxu0
    %v1306 = vrcp.pop %v1303
    %1308 = vrot.lane.b32.xlu0 %v1306, 96
    %v1309 = vpop.permute.xlu0 %1308
    %v1311 = vmul.f32 %v1303, %v1309
    %1312 = vst.msk [vmem:[#allocation10] sm:$0x3] %vm1266, %v1311
    // Predicated region
    $region58: #{_gst_pallas.1} parent=1 // pred_check
      _
    $region59: #{_gst_pallas.1} parent=1 // pred_check_branch
      %1314 = sbr.rel (0) target = $region61
    $region60: #{_gst_pallas.1} parent=1 // pred_region
      %1316 = vsyncadd [#allocation4], 0
      %s1318 = sshll.u32 [#allocation10], 4
      %s1319 = int_to_ptr.vmem [resolvable:$true] %s1318
      %s1320 = sshll.u32 %s10, 4
      %s1321 = int_to_ptr.hbm [resolvable:$true] %s1320
      %1323 = dma.vmem_to_hbm [thread:$0]  %s1319, 32, %s1321, [#allocation4]
    $region61: #{_gst_pallas.1} parent=1 // pred_fallthru
      _
    // Predicated region
    $region62: #{_gst_pallas.1} parent=1 // pred_check
      _
    $region63: #{_gst_pallas.1} parent=1 // pred_check_branch
      %1325 = sbr.rel (0) target = $region65
    $region64: #{_gst_pallas.1} parent=1 // pred_region
      %1327 = dma.done [#allocation4], 32
    $region65: #{_gst_pallas.1} parent=1 // pred_fallthru
      _
    %1328 = vsyncpa [#allocation3], 1
    %1329 = vsyncpa [#allocation6], 1
    %1330 = vsyncpa [#allocation9], 1
    %1331 = vsyncpa [#allocation4], 1

</llo_original>
